<compile_context>
chip_gen: v6e
topology: v6e:2x2x1
jax: 0.10.0
libtpu: 0.0.40
codegen_flags: <defaults>
</compile_context>

<pallas_src>
import functools

import jax
import jax.numpy as jnp
from jax.experimental import pallas as pl
from jax.experimental.pallas import tpu as pltpu

# ----------------------------- config -------------------------------------
VOCAB = 100
VOCAB_PAD = 128          # word-embedding rows zero-padded to a lane multiple
TYPE_VOCAB = 2
TYPE_PAD = 8
HIDDEN = 32
N_HEADS = 2
HEAD_DIM = HIDDEN // N_HEADS
INTER = 64
N_LAYERS = 2
MAX_POS = 16
CONV1_OUT = 256
LN_EPS = 1e-12

# -------------------- packed parameter-slab layout --------------------------
# enc_w (bf16, [ENC_W_ROWS, 3H]):
#   rows [0, EMB_ROWS)  cols [0,H) : word (128 rows) + type (8 rows) embeddings
#   per layer l, base = EMB_ROWS + l*LAYER_ROWS:
#     [base+OFF_WQKV, +H)  cols [0,3H): fused QKV weight
#     [base+OFF_WO,   +H)  cols [0,H) : attention output projection
#     [base+OFF_W1,   +H)  cols [0,I) : FFN up projection
#     [base+OFF_W2,   +I)  cols [0,H) : FFN down projection
EMB_ROWS = VOCAB_PAD + TYPE_PAD          # 136
OFF_WQKV = 0
OFF_WO = HIDDEN
OFF_W1 = 2 * HIDDEN
OFF_W2 = 3 * HIDDEN
LAYER_ROWS = 3 * HIDDEN + INTER          # 160
ENC_W_ROWS = EMB_ROWS + N_LAYERS * LAYER_ROWS
ENC_W_COLS = 3 * HIDDEN                  # 96

# conv_w (bf16, [CONV_ROWS, 256]): conv1 im2col weight (2H x 256), then the
# conv2 weight as two 256-wide rows (tap0, tap1).
CONV_ROWS = 2 * HIDDEN + 2               # 66

# vec (f32, [VEC_ROWS, 256]): every LayerNorm / bias vector, one per row.
VEC_EMB_G, VEC_EMB_B, VEC_C1B, VEC_C2B = 0, 1, 2, 3
VEC_LAYER0 = 4
# per-layer rows: +0 bqkv | +1 bo | +2 ln1_g | +3 ln1_b | +4 b1 | +5 b2
#                 | +6 ln2_g | +7 ln2_b
VEC_PER_LAYER = 8
VEC_ROWS = VEC_LAYER0 + N_LAYERS * VEC_PER_LAYER   # 20


# --------------------------- fused Pallas kernel ---------------------------
def _layer_norm(x, g, b):
    mu = jnp.mean(x, axis=-1, keepdims=True)
    xc = x - mu
    var = jnp.mean(xc * xc, axis=-1, keepdims=True)
    return xc * jax.lax.rsqrt(var + LN_EPS) * g + b


def _fused_forward_kernel(tok_ref, aux_ref, encw_ref, convw_ref, vec_ref,
                          out_ref, *, B, S):
    f32 = jnp.float32
    bf16 = jnp.bfloat16
    BS = B * S

    # ---------------- embeddings: one fused (word|type) one-hot matmul ------
    ids = tok_ref[:, 0:1]                                   # (BS, 1) int32
    tt = tok_ref[:, 1:2]                                    # (BS, 1) int32
    # TODO(synk): ids >= VOCAB silently map to a zero word embedding.
    iota = jax.lax.broadcasted_iota(jnp.int32, (BS, EMB_ROWS), 1)
    hit_word = (iota == ids) & (iota < VOCAB_PAD)
    hit_type = ((iota - VOCAB_PAD) == tt) & (iota >= VOCAB_PAD)
    onehot = (hit_word | hit_type).astype(f32).astype(bf16)  # exact 0/1 in bf16
    h = jnp.dot(onehot, encw_ref[0:EMB_ROWS, 0:HIDDEN],
                preferred_element_type=f32)
    h = h + aux_ref[0:BS, 0:HIDDEN]                         # host-tiled pos. emb
    h = _layer_norm(h, vec_ref[VEC_EMB_G:VEC_EMB_G + 1, 0:HIDDEN],
                    vec_ref[VEC_EMB_B:VEC_EMB_B + 1, 0:HIDDEN])

    # host-precomputed additive mask: block-diagonal batch x key padding
    addmask = aux_ref[BS:2 * BS, 0:BS]                      # (BS, BS) f32
    scale = 1.0 / float(HEAD_DIM) ** 0.5

    # ---------------- transformer encoder layers (statically unrolled) ------
    for l in range(N_LAYERS):
        wb = EMB_ROWS + l * LAYER_ROWS
        vb = VEC_LAYER0 + l * VEC_PER_LAYER
        x = h                                               # (BS, H) f32

        qkv = jnp.dot(
            x.astype(bf16),
            encw_ref[wb + OFF_WQKV:wb + OFF_WQKV + HIDDEN, 0:3 * HIDDEN],
            preferred_element_type=f32) + vec_ref[vb:vb + 1, 0:3 * HIDDEN]

        # issue both heads' (BS,BS) score matmuls before either softmax
        scores = []
        for hd in range(N_HEADS):
            o = hd * HEAD_DIM
            q = qkv[:, o:o + HEAD_DIM]
            k = qkv[:, HIDDEN + o:HIDDEN + o + HEAD_DIM]
            s = jax.lax.dot_general(q, k, (((1,), (1,)), ((), ())),
                                    preferred_element_type=f32)
            scores.append(s * scale + addmask)

        ctxs = []
        for hd in range(N_HEADS):
            o = hd * HEAD_DIM
            s = scores[hd]
            s = s - jnp.max(s, axis=-1, keepdims=True)
            p = jnp.exp(s)                                  # row denom >= 1
            p = p * pl.reciprocal(jnp.sum(p, axis=-1, keepdims=True),
                                  approx=True)
            v = qkv[:, 2 * HIDDEN + o:2 * HIDDEN + o + HEAD_DIM].astype(bf16)
            ctxs.append(jnp.dot(p.astype(bf16), v, preferred_element_type=f32))

        # heads are lane-adjacent -> single (BS,H)x(H,H) output projection
        ctx = jnp.concatenate(ctxs, axis=-1).astype(bf16)
        attn = jnp.dot(ctx, encw_ref[wb + OFF_WO:wb + OFF_WO + HIDDEN, 0:HIDDEN],
                       preferred_element_type=f32) + vec_ref[vb + 1:vb + 2, 0:HIDDEN]

        h1 = _layer_norm(x + attn, vec_ref[vb + 2:vb + 3, 0:HIDDEN],
                         vec_ref[vb + 3:vb + 4, 0:HIDDEN])
        ff = jnp.dot(h1.astype(bf16),
                     encw_ref[wb + OFF_W1:wb + OFF_W1 + HIDDEN, 0:INTER],
                     preferred_element_type=f32) + vec_ref[vb + 4:vb + 5, 0:INTER]
        # TODO(synk): HF BERT uses exact (erf) GELU; tanh approximation here.
        ff = jax.nn.gelu(ff, approximate=True)
        ff = jnp.dot(ff.astype(bf16),
                     encw_ref[wb + OFF_W2:wb + OFF_W2 + INTER, 0:HIDDEN],
                     preferred_element_type=f32) + vec_ref[vb + 5:vb + 6, 0:HIDDEN]
        h = _layer_norm(h1 + ff, vec_ref[vb + 6:vb + 7, 0:HIDDEN],
                        vec_ref[vb + 7:vb + 8, 0:HIDDEN])

    # ---------------- conv head ---------------------------------------------
    # conv1 (H->256, k=2): pre[t] = h[t]@W0 + h[t+1]@W1 + b.  The "t+1" tap is
    # a sublane roll; the wrap-around rows (t = S-1) are excluded by selA/selB.
    h_next = pltpu.roll(h, shift=BS - 1, axis=0)   # == jnp.roll(h, -1, 0)
    hh = jnp.concatenate([h, h_next], axis=-1).astype(bf16)       # (BS, 2H)
    pre = jnp.dot(hh, convw_ref[0:2 * HIDDEN, :], preferred_element_type=f32) \
        + vec_ref[VEC_C1B:VEC_C1B + 1, 0:CONV1_OUT]
    y1 = jnp.maximum(pre, 0.0).astype(bf16)                       # (BS, 256)

    # conv2 (256->1, k=2) + mean over length, reassociated:
    #   mean = ((sum_{0<=t<=S-3} y1[t]).w2a + (sum_{1<=t<=S-2} y1[t]).w2b)
    #          / (S-2) + b2
    selAB = aux_ref[2 * BS:2 * BS + 2 * B, 0:BS].astype(bf16)     # (2B, BS)
    sums = jnp.dot(selAB, y1, preferred_element_type=f32)         # (2B, 256)
    c2 = convw_ref[2 * HIDDEN:2 * HIDDEN + 2, :].astype(f32)      # (2, 256)
    red = sums[0:B, :] * c2[0:1, :] + sums[B:2 * B, :] * c2[1:2, :]
    out = jnp.sum(red, axis=-1, keepdims=True) * (1.0 / float(S - 2)) \
        + vec_ref[VEC_C2B:VEC_C2B + 1, 0:1]
    out_ref[...] = out.astype(out_ref.dtype)


# ------------------------------ params --------------------------------------
def init_params(key):
    ks = iter(jax.random.split(key, 16))

    def nrm(shape, s=0.02):
        return (s * jax.random.normal(next(ks), shape)).astype(jnp.float32)

    enc = jnp.zeros((ENC_W_ROWS, ENC_W_COLS), jnp.float32)
    enc = enc.at[0:VOCAB, 0:HIDDEN].set(nrm((VOCAB, HIDDEN)))
    enc = enc.at[VOCAB_PAD:VOCAB_PAD + TYPE_VOCAB, 0:HIDDEN].set(
        nrm((TYPE_VOCAB, HIDDEN)))
    for l in range(N_LAYERS):
        wb = EMB_ROWS + l * LAYER_ROWS
        enc = enc.at[wb + OFF_WQKV:wb + OFF_WQKV + HIDDEN, 0:3 * HIDDEN].set(
            nrm((HIDDEN, 3 * HIDDEN)))
        enc = enc.at[wb + OFF_WO:wb + OFF_WO + HIDDEN, 0:HIDDEN].set(
            nrm((HIDDEN, HIDDEN)))
        enc = enc.at[wb + OFF_W1:wb + OFF_W1 + HIDDEN, 0:INTER].set(
            nrm((HIDDEN, INTER)))
        enc = enc.at[wb + OFF_W2:wb + OFF_W2 + INTER, 0:HIDDEN].set(
            nrm((INTER, HIDDEN)))

    pos_emb = nrm((MAX_POS, HIDDEN))

    conv = jnp.zeros((CONV_ROWS, CONV1_OUT), jnp.float32)
    conv = conv.at[0:2 * HIDDEN, :].set(nrm((2 * HIDDEN, CONV1_OUT), 0.05))
    c2 = nrm((2 * CONV1_OUT, 1), 0.05)
    conv = conv.at[2 * HIDDEN, :].set(c2[:CONV1_OUT, 0])
    conv = conv.at[2 * HIDDEN + 1, :].set(c2[CONV1_OUT:, 0])

    vec = jnp.zeros((VEC_ROWS, CONV1_OUT), jnp.float32)
    vec = vec.at[VEC_EMB_G, 0:HIDDEN].set(1.0)
    for l in range(N_LAYERS):
        vb = VEC_LAYER0 + l * VEC_PER_LAYER
        vec = vec.at[vb + 2, 0:HIDDEN].set(1.0)   # ln1_g
        vec = vec.at[vb + 6, 0:HIDDEN].set(1.0)   # ln2_g

    return {
        "enc_w": enc.astype(jnp.bfloat16),
        "conv_w": conv.astype(jnp.bfloat16),
        "vec": vec,
        "pos_emb": pos_emb,
    }


# ------------------------------ wrapper --------------------------------------
def bert_classifier_forward(params, input_ids, attention_mask, token_type_ids):
    B, S = input_ids.shape
    BS = B * S
    f32 = jnp.float32

    ids = input_ids.reshape(BS).astype(jnp.int32)
    tt = token_type_ids.reshape(BS).astype(jnp.int32)
    tok = jnp.stack([ids, tt], axis=1)                      # (BS, 2) int32

    # host-side (XLA) precompute of tiny static / mask tensors, packed into one
    # f32 "aux" slab:
    #   rows [0, BS)        cols [0,H)  : positional embedding tiled to (BS, H)
    #   rows [BS, 2BS)      cols [0,BS) : additive attention mask (0 / -1e9)
    #   rows [2BS, 2BS+2B)  cols [0,BS) : selA ; selB conv-head selectors
    bidx = jnp.arange(BS) // S
    tpos = jnp.arange(BS) % S
    key_ok = attention_mask.reshape(BS).astype(f32)
    same_b = (bidx[:, None] == bidx[None, :]).astype(f32)
    addmask = (same_b * key_ok[None, :] - 1.0) * 1e9        # (BS, BS)
    bb = jnp.arange(B)[:, None]
    in_b = bidx[None, :] == bb
    selA = (in_b & (tpos[None, :] <= S - 3)).astype(f32)    # (B, BS)
    selB = (in_b & (tpos[None, :] >= 1) & (tpos[None, :] <= S - 2)).astype(f32)

    aux_w = max(HIDDEN, BS)
    aux = jnp.zeros((2 * BS + 2 * B, aux_w), f32)
    aux = aux.at[0:BS, 0:HIDDEN].set(jnp.tile(params["pos_emb"][:S], (B, 1)))
    aux = aux.at[BS:2 * BS, 0:BS].set(addmask)
    aux = aux.at[2 * BS:2 * BS + B, 0:BS].set(selA)
    aux = aux.at[2 * BS + B:2 * BS + 2 * B, 0:BS].set(selB)

    kernel = functools.partial(_fused_forward_kernel, B=B, S=S)
    vmem = lambda: pl.BlockSpec(memory_space=pltpu.MemorySpace.VMEM)
    return pl.pallas_call(
        kernel,
        out_shape=jax.ShapeDtypeStruct((B, 1), jnp.float32),
        in_specs=[vmem() for _ in range(5)],
        out_specs=vmem(),
    )(tok, aux, params["enc_w"], params["conv_w"], params["vec"])


# ------------------------------- main ---------------------------------------
if __name__ == "__main__":
    key = jax.random.PRNGKey(0)
    pkey, dkey = jax.random.split(key)
    params = init_params(pkey)

    B, S = 2, 8
    input_ids = jax.random.randint(dkey, (B, S), 0, VOCAB, dtype=jnp.int32)
    attention_mask = jnp.ones((B, S), dtype=jnp.int32)
    token_type_ids = jnp.zeros((B, S), dtype=jnp.int32)

    fwd = jax.jit(bert_classifier_forward)
    out = fwd(params, input_ids, attention_mask, token_type_ids)
    jax.block_until_ready(out)

    assert out.shape == (B, 1), out.shape
    assert out.dtype == jnp.float32
    print("KERNEL_OK")
</pallas_src>

<mosaic_0001>
module attributes {stable_mosaic.version = 11 : i64} {
  func.func @_fused_forward_kernel(%arg0: memref<16x2xi32, #tpu.memory_space<vmem>>, %arg1: memref<36x32xf32, #tpu.memory_space<vmem>>, %arg2: memref<456x96xbf16, #tpu.memory_space<vmem>>, %arg3: memref<66x256xbf16, #tpu.memory_space<vmem>>, %arg4: memref<20x256xf32, #tpu.memory_space<vmem>>, %arg5: memref<2x1xf32, #tpu.memory_space<vmem>>) attributes {dimension_semantics = [], scalar_prefetch = 0 : i64, scratch_operands = 0 : i64, tpu.core_type = #tpu.core_type<tc>} {
    %c0 = arith.constant 0 : index
    %c0_0 = arith.constant 0 : index
    %0 = vector.load %arg0[%c0, %c0_0] : memref<16x2xi32, #tpu.memory_space<vmem>>, vector<16x1xi32>
    %c0_1 = arith.constant 0 : index
    %c1 = arith.constant 1 : index
    %1 = vector.load %arg0[%c0_1, %c1] : memref<16x2xi32, #tpu.memory_space<vmem>>, vector<16x1xi32>
    %2 = tpu.iota {dimensions = array<i32: 1>} : vector<16x136xi32>
    %3 = vector.broadcast %0 : vector<16x1xi32> to vector<16x136xi32>
    %4 = arith.cmpi eq, %2, %3 : vector<16x136xi32>
    %c128_i32 = arith.constant 128 : i32
    %5 = vector.broadcast %c128_i32 : i32 to vector<16x136xi32>
    %6 = arith.cmpi slt, %2, %5 : vector<16x136xi32>
    %7 = arith.andi %4, %6 : vector<16x136xi1>
    %c128_i32_2 = arith.constant 128 : i32
    %8 = vector.broadcast %c128_i32_2 : i32 to vector<16x136xi32>
    %9 = arith.subi %2, %8 : vector<16x136xi32>
    %10 = vector.broadcast %1 : vector<16x1xi32> to vector<16x136xi32>
    %11 = arith.cmpi eq, %9, %10 : vector<16x136xi32>
    %c128_i32_3 = arith.constant 128 : i32
    %12 = vector.broadcast %c128_i32_3 : i32 to vector<16x136xi32>
    %13 = arith.cmpi sge, %2, %12 : vector<16x136xi32>
    %14 = arith.andi %11, %13 : vector<16x136xi1>
    %15 = arith.ori %7, %14 : vector<16x136xi1>
    %16 = arith.extui %15 : vector<16x136xi1> to vector<16x136xi32>
    %17 = arith.sitofp %16 : vector<16x136xi32> to vector<16x136xf32>
    %18 = arith.truncf %17 : vector<16x136xf32> to vector<16x136xbf16>
    %c0_4 = arith.constant 0 : index
    %c0_5 = arith.constant 0 : index
    %19 = vector.load %arg2[%c0_4, %c0_5] : memref<456x96xbf16, #tpu.memory_space<vmem>>, vector<136x32xbf16>
    %cst = arith.constant dense<0.000000e+00> : vector<16x32xf32>
    %20 = tpu.matmul %18, %19, %cst {dimension_numbers = #tpu.dot_dimension_numbers<[1], [0], [0], [1], [0, 0, 1, 1], [], []>} : vector<16x136xbf16>, vector<136x32xbf16>, vector<16x32xf32> -> vector<16x32xf32>
    %c0_6 = arith.constant 0 : index
    %c0_7 = arith.constant 0 : index
    %21 = vector.load %arg1[%c0_6, %c0_7] : memref<36x32xf32, #tpu.memory_space<vmem>>, vector<16x32xf32>
    %22 = arith.addf %20, %21 : vector<16x32xf32>
    %c0_8 = arith.constant 0 : index
    %c0_9 = arith.constant 0 : index
    %23 = vector.load %arg4[%c0_8, %c0_9] : memref<20x256xf32, #tpu.memory_space<vmem>>, vector<1x32xf32>
    %c1_10 = arith.constant 1 : index
    %c0_11 = arith.constant 0 : index
    %24 = vector.load %arg4[%c1_10, %c0_11] : memref<20x256xf32, #tpu.memory_space<vmem>>, vector<1x32xf32>
    %cst_12 = arith.constant dense<0.000000e+00> : vector<16xf32>
    %25 = vector.multi_reduction <add>, %22, %cst_12 [1] : vector<16x32xf32> to vector<16xf32>
    %26 = vector.shape_cast %25 : vector<16xf32> to vector<16x1xf32>
    %cst_13 = arith.constant 3.200000e+01 : f32
    %27 = vector.broadcast %cst_13 : f32 to vector<16x1xf32>
    %28 = arith.divf %26, %27 : vector<16x1xf32>
    %29 = vector.broadcast %28 : vector<16x1xf32> to vector<16x32xf32>
    %30 = arith.subf %22, %29 : vector<16x32xf32>
    %31 = arith.mulf %30, %30 : vector<16x32xf32>
    %cst_14 = arith.constant dense<0.000000e+00> : vector<16xf32>
    %32 = vector.multi_reduction <add>, %31, %cst_14 [1] : vector<16x32xf32> to vector<16xf32>
    %33 = vector.shape_cast %32 : vector<16xf32> to vector<16x1xf32>
    %cst_15 = arith.constant 3.200000e+01 : f32
    %34 = vector.broadcast %cst_15 : f32 to vector<16x1xf32>
    %35 = arith.divf %33, %34 : vector<16x1xf32>
    %cst_16 = arith.constant 9.99999996E-13 : f32
    %36 = vector.broadcast %cst_16 : f32 to vector<16x1xf32>
    %37 = arith.addf %35, %36 : vector<16x1xf32>
    %38 = math.rsqrt %37 : vector<16x1xf32>
    %39 = vector.broadcast %38 : vector<16x1xf32> to vector<16x32xf32>
    %40 = arith.mulf %30, %39 : vector<16x32xf32>
    %41 = vector.broadcast %23 : vector<1x32xf32> to vector<16x32xf32>
    %42 = arith.mulf %40, %41 : vector<16x32xf32>
    %43 = vector.broadcast %24 : vector<1x32xf32> to vector<16x32xf32>
    %44 = arith.addf %42, %43 : vector<16x32xf32>
    %c16 = arith.constant 16 : index
    %c0_17 = arith.constant 0 : index
    %45 = vector.load %arg1[%c16, %c0_17] : memref<36x32xf32, #tpu.memory_space<vmem>>, vector<16x16xf32>
    %46 = arith.truncf %44 : vector<16x32xf32> to vector<16x32xbf16>
    %c136 = arith.constant 136 : index
    %c0_18 = arith.constant 0 : index
    %47 = vector.load %arg2[%c136, %c0_18] : memref<456x96xbf16, #tpu.memory_space<vmem>>, vector<32x96xbf16>
    %cst_19 = arith.constant dense<0.000000e+00> : vector<16x96xf32>
    %48 = tpu.matmul %46, %47, %cst_19 {dimension_numbers = #tpu.dot_dimension_numbers<[1], [0], [0], [1], [0, 0, 1, 1], [], []>} : vector<16x32xbf16>, vector<32x96xbf16>, vector<16x96xf32> -> vector<16x96xf32>
    %c4 = arith.constant 4 : index
    %c0_20 = arith.constant 0 : index
    %49 = vector.load %arg4[%c4, %c0_20] : memref<20x256xf32, #tpu.memory_space<vmem>>, vector<1x96xf32>
    %50 = vector.broadcast %49 : vector<1x96xf32> to vector<16x96xf32>
    %51 = arith.addf %48, %50 : vector<16x96xf32>
    %52 = vector.extract_strided_slice %51 {offsets = [0, 0], sizes = [16, 16], strides = [1, 1]} : vector<16x96xf32> to vector<16x16xf32>
    %53 = vector.extract_strided_slice %51 {offsets = [0, 32], sizes = [16, 16], strides = [1, 1]} : vector<16x96xf32> to vector<16x16xf32>
    %cst_21 = arith.constant dense<0.000000e+00> : vector<16x16xf32>
    %54 = tpu.matmul %52, %53, %cst_21 {dimension_numbers = #tpu.dot_dimension_numbers<[1], [1], [0], [0], [0, 0, 1, 0], [], []>} : vector<16x16xf32>, vector<16x16xf32>, vector<16x16xf32> -> vector<16x16xf32>
    %cst_22 = arith.constant 2.500000e-01 : f32
    %55 = vector.broadcast %cst_22 : f32 to vector<16x16xf32>
    %56 = arith.mulf %54, %55 : vector<16x16xf32>
    %57 = arith.addf %56, %45 : vector<16x16xf32>
    %58 = vector.extract_strided_slice %51 {offsets = [0, 16], sizes = [16, 16], strides = [1, 1]} : vector<16x96xf32> to vector<16x16xf32>
    %59 = vector.extract_strided_slice %51 {offsets = [0, 48], sizes = [16, 16], strides = [1, 1]} : vector<16x96xf32> to vector<16x16xf32>
    %cst_23 = arith.constant dense<0.000000e+00> : vector<16x16xf32>
    %60 = tpu.matmul %58, %59, %cst_23 {dimension_numbers = #tpu.dot_dimension_numbers<[1], [1], [0], [0], [0, 0, 1, 0], [], []>} : vector<16x16xf32>, vector<16x16xf32>, vector<16x16xf32> -> vector<16x16xf32>
    %cst_24 = arith.constant 2.500000e-01 : f32
    %61 = vector.broadcast %cst_24 : f32 to vector<16x16xf32>
    %62 = arith.mulf %60, %61 : vector<16x16xf32>
    %63 = arith.addf %62, %45 : vector<16x16xf32>
    %cst_25 = arith.constant dense<0xFF800000> : vector<16xf32>
    %64 = vector.multi_reduction <maximumf>, %57, %cst_25 [1] : vector<16x16xf32> to vector<16xf32>
    %65 = vector.shape_cast %64 : vector<16xf32> to vector<16x1xf32>
    %66 = vector.broadcast %65 : vector<16x1xf32> to vector<16x16xf32>
    %67 = arith.subf %57, %66 : vector<16x16xf32>
    %68 = math.exp %67 : vector<16x16xf32>
    %cst_26 = arith.constant dense<0.000000e+00> : vector<16xf32>
    %69 = vector.multi_reduction <add>, %68, %cst_26 [1] : vector<16x16xf32> to vector<16xf32>
    %70 = vector.shape_cast %69 : vector<16xf32> to vector<16x1xf32>
    %71 = tpu.reciprocal %70 {approx = true} : vector<16x1xf32> -> vector<16x1xf32>
    %72 = vector.broadcast %71 : vector<16x1xf32> to vector<16x16xf32>
    %73 = arith.mulf %68, %72 : vector<16x16xf32>
    %74 = vector.extract_strided_slice %51 {offsets = [0, 64], sizes = [16, 16], strides = [1, 1]} : vector<16x96xf32> to vector<16x16xf32>
    %75 = arith.truncf %74 : vector<16x16xf32> to vector<16x16xbf16>
    %76 = arith.truncf %73 : vector<16x16xf32> to vector<16x16xbf16>
    %cst_27 = arith.constant dense<0.000000e+00> : vector<16x16xf32>
    %77 = tpu.matmul %76, %75, %cst_27 {dimension_numbers = #tpu.dot_dimension_numbers<[1], [0], [0], [1], [0, 0, 1, 1], [], []>} : vector<16x16xbf16>, vector<16x16xbf16>, vector<16x16xf32> -> vector<16x16xf32>
    %cst_28 = arith.constant dense<0xFF800000> : vector<16xf32>
    %78 = vector.multi_reduction <maximumf>, %63, %cst_28 [1] : vector<16x16xf32> to vector<16xf32>
    %79 = vector.shape_cast %78 : vector<16xf32> to vector<16x1xf32>
    %80 = vector.broadcast %79 : vector<16x1xf32> to vector<16x16xf32>
    %81 = arith.subf %63, %80 : vector<16x16xf32>
    %82 = math.exp %81 : vector<16x16xf32>
    %cst_29 = arith.constant dense<0.000000e+00> : vector<16xf32>
    %83 = vector.multi_reduction <add>, %82, %cst_29 [1] : vector<16x16xf32> to vector<16xf32>
    %84 = vector.shape_cast %83 : vector<16xf32> to vector<16x1xf32>
    %85 = tpu.reciprocal %84 {approx = true} : vector<16x1xf32> -> vector<16x1xf32>
    %86 = vector.broadcast %85 : vector<16x1xf32> to vector<16x16xf32>
    %87 = arith.mulf %82, %86 : vector<16x16xf32>
    %88 = vector.extract_strided_slice %51 {offsets = [0, 80], sizes = [16, 16], strides = [1, 1]} : vector<16x96xf32> to vector<16x16xf32>
    %89 = arith.truncf %88 : vector<16x16xf32> to vector<16x16xbf16>
    %90 = arith.truncf %87 : vector<16x16xf32> to vector<16x16xbf16>
    %cst_30 = arith.constant dense<0.000000e+00> : vector<16x16xf32>
    %91 = tpu.matmul %90, %89, %cst_30 {dimension_numbers = #tpu.dot_dimension_numbers<[1], [0], [0], [1], [0, 0, 1, 1], [], []>} : vector<16x16xbf16>, vector<16x16xbf16>, vector<16x16xf32> -> vector<16x16xf32>
    %92 = tpu.concatenate %77, %91 in 1 : vector<16x16xf32>, vector<16x16xf32> -> vector<16x32xf32>
    %93 = arith.truncf %92 : vector<16x32xf32> to vector<16x32xbf16>
    %c168 = arith.constant 168 : index
    %c0_31 = arith.constant 0 : index
    %94 = vector.load %arg2[%c168, %c0_31] : memref<456x96xbf16, #tpu.memory_space<vmem>>, vector<32x32xbf16>
    %cst_32 = arith.constant dense<0.000000e+00> : vector<16x32xf32>
    %95 = tpu.matmul %93, %94, %cst_32 {dimension_numbers = #tpu.dot_dimension_numbers<[1], [0], [0], [1], [0, 0, 1, 1], [], []>} : vector<16x32xbf16>, vector<32x32xbf16>, vector<16x32xf32> -> vector<16x32xf32>
    %c5 = arith.constant 5 : index
    %c0_33 = arith.constant 0 : index
    %96 = vector.load %arg4[%c5, %c0_33] : memref<20x256xf32, #tpu.memory_space<vmem>>, vector<1x32xf32>
    %97 = vector.broadcast %96 : vector<1x32xf32> to vector<16x32xf32>
    %98 = arith.addf %95, %97 : vector<16x32xf32>
    %99 = arith.addf %44, %98 : vector<16x32xf32>
    %c6 = arith.constant 6 : index
    %c0_34 = arith.constant 0 : index
    %100 = vector.load %arg4[%c6, %c0_34] : memref<20x256xf32, #tpu.memory_space<vmem>>, vector<1x32xf32>
    %c7 = arith.constant 7 : index
    %c0_35 = arith.constant 0 : index
    %101 = vector.load %arg4[%c7, %c0_35] : memref<20x256xf32, #tpu.memory_space<vmem>>, vector<1x32xf32>
    %cst_36 = arith.constant dense<0.000000e+00> : vector<16xf32>
    %102 = vector.multi_reduction <add>, %99, %cst_36 [1] : vector<16x32xf32> to vector<16xf32>
    %103 = vector.shape_cast %102 : vector<16xf32> to vector<16x1xf32>
    %cst_37 = arith.constant 3.200000e+01 : f32
    %104 = vector.broadcast %cst_37 : f32 to vector<16x1xf32>
    %105 = arith.divf %103, %104 : vector<16x1xf32>
    %106 = vector.broadcast %105 : vector<16x1xf32> to vector<16x32xf32>
    %107 = arith.subf %99, %106 : vector<16x32xf32>
    %108 = arith.mulf %107, %107 : vector<16x32xf32>
    %cst_38 = arith.constant dense<0.000000e+00> : vector<16xf32>
    %109 = vector.multi_reduction <add>, %108, %cst_38 [1] : vector<16x32xf32> to vector<16xf32>
    %110 = vector.shape_cast %109 : vector<16xf32> to vector<16x1xf32>
    %cst_39 = arith.constant 3.200000e+01 : f32
    %111 = vector.broadcast %cst_39 : f32 to vector<16x1xf32>
    %112 = arith.divf %110, %111 : vector<16x1xf32>
    %cst_40 = arith.constant 9.99999996E-13 : f32
    %113 = vector.broadcast %cst_40 : f32 to vector<16x1xf32>
    %114 = arith.addf %112, %113 : vector<16x1xf32>
    %115 = math.rsqrt %114 : vector<16x1xf32>
    %116 = vector.broadcast %115 : vector<16x1xf32> to vector<16x32xf32>
    %117 = arith.mulf %107, %116 : vector<16x32xf32>
    %118 = vector.broadcast %100 : vector<1x32xf32> to vector<16x32xf32>
    %119 = arith.mulf %117, %118 : vector<16x32xf32>
    %120 = vector.broadcast %101 : vector<1x32xf32> to vector<16x32xf32>
    %121 = arith.addf %119, %120 : vector<16x32xf32>
    %122 = arith.truncf %121 : vector<16x32xf32> to vector<16x32xbf16>
    %c200 = arith.constant 200 : index
    %c0_41 = arith.constant 0 : index
    %123 = vector.load %arg2[%c200, %c0_41] : memref<456x96xbf16, #tpu.memory_space<vmem>>, vector<32x64xbf16>
    %cst_42 = arith.constant dense<0.000000e+00> : vector<16x64xf32>
    %124 = tpu.matmul %122, %123, %cst_42 {dimension_numbers = #tpu.dot_dimension_numbers<[1], [0], [0], [1], [0, 0, 1, 1], [], []>} : vector<16x32xbf16>, vector<32x64xbf16>, vector<16x64xf32> -> vector<16x64xf32>
    %c8 = arith.constant 8 : index
    %c0_43 = arith.constant 0 : index
    %125 = vector.load %arg4[%c8, %c0_43] : memref<20x256xf32, #tpu.memory_space<vmem>>, vector<1x64xf32>
    %126 = vector.broadcast %125 : vector<1x64xf32> to vector<16x64xf32>
    %127 = arith.addf %124, %126 : vector<16x64xf32>
    %128 = arith.mulf %127, %127 : vector<16x64xf32>
    %129 = arith.mulf %127, %128 : vector<16x64xf32>
    %cst_44 = arith.constant 4.471500e-02 : f32
    %130 = vector.broadcast %cst_44 : f32 to vector<16x64xf32>
    %131 = arith.mulf %130, %129 : vector<16x64xf32>
    %132 = arith.addf %127, %131 : vector<16x64xf32>
    %cst_45 = arith.constant 0.797884583 : f32
    %133 = vector.broadcast %cst_45 : f32 to vector<16x64xf32>
    %134 = arith.mulf %133, %132 : vector<16x64xf32>
    %135 = math.tanh %134 : vector<16x64xf32>
    %cst_46 = arith.constant 1.000000e+00 : f32
    %136 = vector.broadcast %cst_46 : f32 to vector<16x64xf32>
    %137 = arith.addf %136, %135 : vector<16x64xf32>
    %cst_47 = arith.constant 5.000000e-01 : f32
    %138 = vector.broadcast %cst_47 : f32 to vector<16x64xf32>
    %139 = arith.mulf %138, %137 : vector<16x64xf32>
    %140 = arith.mulf %127, %139 : vector<16x64xf32>
    %141 = arith.truncf %140 : vector<16x64xf32> to vector<16x64xbf16>
    %c232 = arith.constant 232 : index
    %c0_48 = arith.constant 0 : index
    %142 = vector.load %arg2[%c232, %c0_48] : memref<456x96xbf16, #tpu.memory_space<vmem>>, vector<64x32xbf16>
    %cst_49 = arith.constant dense<0.000000e+00> : vector<16x32xf32>
    %143 = tpu.matmul %141, %142, %cst_49 {dimension_numbers = #tpu.dot_dimension_numbers<[1], [0], [0], [1], [0, 0, 1, 1], [], []>} : vector<16x64xbf16>, vector<64x32xbf16>, vector<16x32xf32> -> vector<16x32xf32>
    %c9 = arith.constant 9 : index
    %c0_50 = arith.constant 0 : index
    %144 = vector.load %arg4[%c9, %c0_50] : memref<20x256xf32, #tpu.memory_space<vmem>>, vector<1x32xf32>
    %145 = vector.broadcast %144 : vector<1x32xf32> to vector<16x32xf32>
    %146 = arith.addf %143, %145 : vector<16x32xf32>
    %147 = arith.addf %121, %146 : vector<16x32xf32>
    %c10 = arith.constant 10 : index
    %c0_51 = arith.constant 0 : index
    %148 = vector.load %arg4[%c10, %c0_51] : memref<20x256xf32, #tpu.memory_space<vmem>>, vector<1x32xf32>
    %c11 = arith.constant 11 : index
    %c0_52 = arith.constant 0 : index
    %149 = vector.load %arg4[%c11, %c0_52] : memref<20x256xf32, #tpu.memory_space<vmem>>, vector<1x32xf32>
    %cst_53 = arith.constant dense<0.000000e+00> : vector<16xf32>
    %150 = vector.multi_reduction <add>, %147, %cst_53 [1] : vector<16x32xf32> to vector<16xf32>
    %151 = vector.shape_cast %150 : vector<16xf32> to vector<16x1xf32>
    %cst_54 = arith.constant 3.200000e+01 : f32
    %152 = vector.broadcast %cst_54 : f32 to vector<16x1xf32>
    %153 = arith.divf %151, %152 : vector<16x1xf32>
    %154 = vector.broadcast %153 : vector<16x1xf32> to vector<16x32xf32>
    %155 = arith.subf %147, %154 : vector<16x32xf32>
    %156 = arith.mulf %155, %155 : vector<16x32xf32>
    %cst_55 = arith.constant dense<0.000000e+00> : vector<16xf32>
    %157 = vector.multi_reduction <add>, %156, %cst_55 [1] : vector<16x32xf32> to vector<16xf32>
    %158 = vector.shape_cast %157 : vector<16xf32> to vector<16x1xf32>
    %cst_56 = arith.constant 3.200000e+01 : f32
    %159 = vector.broadcast %cst_56 : f32 to vector<16x1xf32>
    %160 = arith.divf %158, %159 : vector<16x1xf32>
    %cst_57 = arith.constant 9.99999996E-13 : f32
    %161 = vector.broadcast %cst_57 : f32 to vector<16x1xf32>
    %162 = arith.addf %160, %161 : vector<16x1xf32>
    %163 = math.rsqrt %162 : vector<16x1xf32>
    %164 = vector.broadcast %163 : vector<16x1xf32> to vector<16x32xf32>
    %165 = arith.mulf %155, %164 : vector<16x32xf32>
    %166 = vector.broadcast %148 : vector<1x32xf32> to vector<16x32xf32>
    %167 = arith.mulf %165, %166 : vector<16x32xf32>
    %168 = vector.broadcast %149 : vector<1x32xf32> to vector<16x32xf32>
    %169 = arith.addf %167, %168 : vector<16x32xf32>
    %170 = arith.truncf %169 : vector<16x32xf32> to vector<16x32xbf16>
    %c296 = arith.constant 296 : index
    %c0_58 = arith.constant 0 : index
    %171 = vector.load %arg2[%c296, %c0_58] : memref<456x96xbf16, #tpu.memory_space<vmem>>, vector<32x96xbf16>
    %cst_59 = arith.constant dense<0.000000e+00> : vector<16x96xf32>
    %172 = tpu.matmul %170, %171, %cst_59 {dimension_numbers = #tpu.dot_dimension_numbers<[1], [0], [0], [1], [0, 0, 1, 1], [], []>} : vector<16x32xbf16>, vector<32x96xbf16>, vector<16x96xf32> -> vector<16x96xf32>
    %c12 = arith.constant 12 : index
    %c0_60 = arith.constant 0 : index
    %173 = vector.load %arg4[%c12, %c0_60] : memref<20x256xf32, #tpu.memory_space<vmem>>, vector<1x96xf32>
    %174 = vector.broadcast %173 : vector<1x96xf32> to vector<16x96xf32>
    %175 = arith.addf %172, %174 : vector<16x96xf32>
    %176 = vector.extract_strided_slice %175 {offsets = [0, 0], sizes = [16, 16], strides = [1, 1]} : vector<16x96xf32> to vector<16x16xf32>
    %177 = vector.extract_strided_slice %175 {offsets = [0, 32], sizes = [16, 16], strides = [1, 1]} : vector<16x96xf32> to vector<16x16xf32>
    %cst_61 = arith.constant dense<0.000000e+00> : vector<16x16xf32>
    %178 = tpu.matmul %176, %177, %cst_61 {dimension_numbers = #tpu.dot_dimension_numbers<[1], [1], [0], [0], [0, 0, 1, 0], [], []>} : vector<16x16xf32>, vector<16x16xf32>, vector<16x16xf32> -> vector<16x16xf32>
    %cst_62 = arith.constant 2.500000e-01 : f32
    %179 = vector.broadcast %cst_62 : f32 to vector<16x16xf32>
    %180 = arith.mulf %178, %179 : vector<16x16xf32>
    %181 = arith.addf %180, %45 : vector<16x16xf32>
    %182 = vector.extract_strided_slice %175 {offsets = [0, 16], sizes = [16, 16], strides = [1, 1]} : vector<16x96xf32> to vector<16x16xf32>
    %183 = vector.extract_strided_slice %175 {offsets = [0, 48], sizes = [16, 16], strides = [1, 1]} : vector<16x96xf32> to vector<16x16xf32>
    %cst_63 = arith.constant dense<0.000000e+00> : vector<16x16xf32>
    %184 = tpu.matmul %182, %183, %cst_63 {dimension_numbers = #tpu.dot_dimension_numbers<[1], [1], [0], [0], [0, 0, 1, 0], [], []>} : vector<16x16xf32>, vector<16x16xf32>, vector<16x16xf32> -> vector<16x16xf32>
    %cst_64 = arith.constant 2.500000e-01 : f32
    %185 = vector.broadcast %cst_64 : f32 to vector<16x16xf32>
    %186 = arith.mulf %184, %185 : vector<16x16xf32>
    %187 = arith.addf %186, %45 : vector<16x16xf32>
    %cst_65 = arith.constant dense<0xFF800000> : vector<16xf32>
    %188 = vector.multi_reduction <maximumf>, %181, %cst_65 [1] : vector<16x16xf32> to vector<16xf32>
    %189 = vector.shape_cast %188 : vector<16xf32> to vector<16x1xf32>
    %190 = vector.broadcast %189 : vector<16x1xf32> to vector<16x16xf32>
    %191 = arith.subf %181, %190 : vector<16x16xf32>
    %192 = math.exp %191 : vector<16x16xf32>
    %cst_66 = arith.constant dense<0.000000e+00> : vector<16xf32>
    %193 = vector.multi_reduction <add>, %192, %cst_66 [1] : vector<16x16xf32> to vector<16xf32>
    %194 = vector.shape_cast %193 : vector<16xf32> to vector<16x1xf32>
    %195 = tpu.reciprocal %194 {approx = true} : vector<16x1xf32> -> vector<16x1xf32>
    %196 = vector.broadcast %195 : vector<16x1xf32> to vector<16x16xf32>
    %197 = arith.mulf %192, %196 : vector<16x16xf32>
    %198 = vector.extract_strided_slice %175 {offsets = [0, 64], sizes = [16, 16], strides = [1, 1]} : vector<16x96xf32> to vector<16x16xf32>
    %199 = arith.truncf %198 : vector<16x16xf32> to vector<16x16xbf16>
    %200 = arith.truncf %197 : vector<16x16xf32> to vector<16x16xbf16>
    %cst_67 = arith.constant dense<0.000000e+00> : vector<16x16xf32>
    %201 = tpu.matmul %200, %199, %cst_67 {dimension_numbers = #tpu.dot_dimension_numbers<[1], [0], [0], [1], [0, 0, 1, 1], [], []>} : vector<16x16xbf16>, vector<16x16xbf16>, vector<16x16xf32> -> vector<16x16xf32>
    %cst_68 = arith.constant dense<0xFF800000> : vector<16xf32>
    %202 = vector.multi_reduction <maximumf>, %187, %cst_68 [1] : vector<16x16xf32> to vector<16xf32>
    %203 = vector.shape_cast %202 : vector<16xf32> to vector<16x1xf32>
    %204 = vector.broadcast %203 : vector<16x1xf32> to vector<16x16xf32>
    %205 = arith.subf %187, %204 : vector<16x16xf32>
    %206 = math.exp %205 : vector<16x16xf32>
    %cst_69 = arith.constant dense<0.000000e+00> : vector<16xf32>
    %207 = vector.multi_reduction <add>, %206, %cst_69 [1] : vector<16x16xf32> to vector<16xf32>
    %208 = vector.shape_cast %207 : vector<16xf32> to vector<16x1xf32>
    %209 = tpu.reciprocal %208 {approx = true} : vector<16x1xf32> -> vector<16x1xf32>
    %210 = vector.broadcast %209 : vector<16x1xf32> to vector<16x16xf32>
    %211 = arith.mulf %206, %210 : vector<16x16xf32>
    %212 = vector.extract_strided_slice %175 {offsets = [0, 80], sizes = [16, 16], strides = [1, 1]} : vector<16x96xf32> to vector<16x16xf32>
    %213 = arith.truncf %212 : vector<16x16xf32> to vector<16x16xbf16>
    %214 = arith.truncf %211 : vector<16x16xf32> to vector<16x16xbf16>
    %cst_70 = arith.constant dense<0.000000e+00> : vector<16x16xf32>
    %215 = tpu.matmul %214, %213, %cst_70 {dimension_numbers = #tpu.dot_dimension_numbers<[1], [0], [0], [1], [0, 0, 1, 1], [], []>} : vector<16x16xbf16>, vector<16x16xbf16>, vector<16x16xf32> -> vector<16x16xf32>
    %216 = tpu.concatenate %201, %215 in 1 : vector<16x16xf32>, vector<16x16xf32> -> vector<16x32xf32>
    %217 = arith.truncf %216 : vector<16x32xf32> to vector<16x32xbf16>
    %c328 = arith.constant 328 : index
    %c0_71 = arith.constant 0 : index
    %218 = vector.load %arg2[%c328, %c0_71] : memref<456x96xbf16, #tpu.memory_space<vmem>>, vector<32x32xbf16>
    %cst_72 = arith.constant dense<0.000000e+00> : vector<16x32xf32>
    %219 = tpu.matmul %217, %218, %cst_72 {dimension_numbers = #tpu.dot_dimension_numbers<[1], [0], [0], [1], [0, 0, 1, 1], [], []>} : vector<16x32xbf16>, vector<32x32xbf16>, vector<16x32xf32> -> vector<16x32xf32>
    %c13 = arith.constant 13 : index
    %c0_73 = arith.constant 0 : index
    %220 = vector.load %arg4[%c13, %c0_73] : memref<20x256xf32, #tpu.memory_space<vmem>>, vector<1x32xf32>
    %221 = vector.broadcast %220 : vector<1x32xf32> to vector<16x32xf32>
    %222 = arith.addf %219, %221 : vector<16x32xf32>
    %223 = arith.addf %169, %222 : vector<16x32xf32>
    %c14 = arith.constant 14 : index
    %c0_74 = arith.constant 0 : index
    %224 = vector.load %arg4[%c14, %c0_74] : memref<20x256xf32, #tpu.memory_space<vmem>>, vector<1x32xf32>
    %c15 = arith.constant 15 : index
    %c0_75 = arith.constant 0 : index
    %225 = vector.load %arg4[%c15, %c0_75] : memref<20x256xf32, #tpu.memory_space<vmem>>, vector<1x32xf32>
    %cst_76 = arith.constant dense<0.000000e+00> : vector<16xf32>
    %226 = vector.multi_reduction <add>, %223, %cst_76 [1] : vector<16x32xf32> to vector<16xf32>
    %227 = vector.shape_cast %226 : vector<16xf32> to vector<16x1xf32>
    %cst_77 = arith.constant 3.200000e+01 : f32
    %228 = vector.broadcast %cst_77 : f32 to vector<16x1xf32>
    %229 = arith.divf %227, %228 : vector<16x1xf32>
    %230 = vector.broadcast %229 : vector<16x1xf32> to vector<16x32xf32>
    %231 = arith.subf %223, %230 : vector<16x32xf32>
    %232 = arith.mulf %231, %231 : vector<16x32xf32>
    %cst_78 = arith.constant dense<0.000000e+00> : vector<16xf32>
    %233 = vector.multi_reduction <add>, %232, %cst_78 [1] : vector<16x32xf32> to vector<16xf32>
    %234 = vector.shape_cast %233 : vector<16xf32> to vector<16x1xf32>
    %cst_79 = arith.constant 3.200000e+01 : f32
    %235 = vector.broadcast %cst_79 : f32 to vector<16x1xf32>
    %236 = arith.divf %234, %235 : vector<16x1xf32>
    %cst_80 = arith.constant 9.99999996E-13 : f32
    %237 = vector.broadcast %cst_80 : f32 to vector<16x1xf32>
    %238 = arith.addf %236, %237 : vector<16x1xf32>
    %239 = math.rsqrt %238 : vector<16x1xf32>
    %240 = vector.broadcast %239 : vector<16x1xf32> to vector<16x32xf32>
    %241 = arith.mulf %231, %240 : vector<16x32xf32>
    %242 = vector.broadcast %224 : vector<1x32xf32> to vector<16x32xf32>
    %243 = arith.mulf %241, %242 : vector<16x32xf32>
    %244 = vector.broadcast %225 : vector<1x32xf32> to vector<16x32xf32>
    %245 = arith.addf %243, %244 : vector<16x32xf32>
    %246 = arith.truncf %245 : vector<16x32xf32> to vector<16x32xbf16>
    %c360 = arith.constant 360 : index
    %c0_81 = arith.constant 0 : index
    %247 = vector.load %arg2[%c360, %c0_81] : memref<456x96xbf16, #tpu.memory_space<vmem>>, vector<32x64xbf16>
    %cst_82 = arith.constant dense<0.000000e+00> : vector<16x64xf32>
    %248 = tpu.matmul %246, %247, %cst_82 {dimension_numbers = #tpu.dot_dimension_numbers<[1], [0], [0], [1], [0, 0, 1, 1], [], []>} : vector<16x32xbf16>, vector<32x64xbf16>, vector<16x64xf32> -> vector<16x64xf32>
    %c16_83 = arith.constant 16 : index
    %c0_84 = arith.constant 0 : index
    %249 = vector.load %arg4[%c16_83, %c0_84] : memref<20x256xf32, #tpu.memory_space<vmem>>, vector<1x64xf32>
    %250 = vector.broadcast %249 : vector<1x64xf32> to vector<16x64xf32>
    %251 = arith.addf %248, %250 : vector<16x64xf32>
    %252 = arith.mulf %251, %251 : vector<16x64xf32>
    %253 = arith.mulf %251, %252 : vector<16x64xf32>
    %cst_85 = arith.constant 4.471500e-02 : f32
    %254 = vector.broadcast %cst_85 : f32 to vector<16x64xf32>
    %255 = arith.mulf %254, %253 : vector<16x64xf32>
    %256 = arith.addf %251, %255 : vector<16x64xf32>
    %cst_86 = arith.constant 0.797884583 : f32
    %257 = vector.broadcast %cst_86 : f32 to vector<16x64xf32>
    %258 = arith.mulf %257, %256 : vector<16x64xf32>
    %259 = math.tanh %258 : vector<16x64xf32>
    %cst_87 = arith.constant 1.000000e+00 : f32
    %260 = vector.broadcast %cst_87 : f32 to vector<16x64xf32>
    %261 = arith.addf %260, %259 : vector<16x64xf32>
    %cst_88 = arith.constant 5.000000e-01 : f32
    %262 = vector.broadcast %cst_88 : f32 to vector<16x64xf32>
    %263 = arith.mulf %262, %261 : vector<16x64xf32>
    %264 = arith.mulf %251, %263 : vector<16x64xf32>
    %265 = arith.truncf %264 : vector<16x64xf32> to vector<16x64xbf16>
    %c392 = arith.constant 392 : index
    %c0_89 = arith.constant 0 : index
    %266 = vector.load %arg2[%c392, %c0_89] : memref<456x96xbf16, #tpu.memory_space<vmem>>, vector<64x32xbf16>
    %cst_90 = arith.constant dense<0.000000e+00> : vector<16x32xf32>
    %267 = tpu.matmul %265, %266, %cst_90 {dimension_numbers = #tpu.dot_dimension_numbers<[1], [0], [0], [1], [0, 0, 1, 1], [], []>} : vector<16x64xbf16>, vector<64x32xbf16>, vector<16x32xf32> -> vector<16x32xf32>
    %c17 = arith.constant 17 : index
    %c0_91 = arith.constant 0 : index
    %268 = vector.load %arg4[%c17, %c0_91] : memref<20x256xf32, #tpu.memory_space<vmem>>, vector<1x32xf32>
    %269 = vector.broadcast %268 : vector<1x32xf32> to vector<16x32xf32>
    %270 = arith.addf %267, %269 : vector<16x32xf32>
    %271 = arith.addf %245, %270 : vector<16x32xf32>
    %c18 = arith.constant 18 : index
    %c0_92 = arith.constant 0 : index
    %272 = vector.load %arg4[%c18, %c0_92] : memref<20x256xf32, #tpu.memory_space<vmem>>, vector<1x32xf32>
    %c19 = arith.constant 19 : index
    %c0_93 = arith.constant 0 : index
    %273 = vector.load %arg4[%c19, %c0_93] : memref<20x256xf32, #tpu.memory_space<vmem>>, vector<1x32xf32>
    %cst_94 = arith.constant dense<0.000000e+00> : vector<16xf32>
    %274 = vector.multi_reduction <add>, %271, %cst_94 [1] : vector<16x32xf32> to vector<16xf32>
    %275 = vector.shape_cast %274 : vector<16xf32> to vector<16x1xf32>
    %cst_95 = arith.constant 3.200000e+01 : f32
    %276 = vector.broadcast %cst_95 : f32 to vector<16x1xf32>
    %277 = arith.divf %275, %276 : vector<16x1xf32>
    %278 = vector.broadcast %277 : vector<16x1xf32> to vector<16x32xf32>
    %279 = arith.subf %271, %278 : vector<16x32xf32>
    %280 = arith.mulf %279, %279 : vector<16x32xf32>
    %cst_96 = arith.constant dense<0.000000e+00> : vector<16xf32>
    %281 = vector.multi_reduction <add>, %280, %cst_96 [1] : vector<16x32xf32> to vector<16xf32>
    %282 = vector.shape_cast %281 : vector<16xf32> to vector<16x1xf32>
    %cst_97 = arith.constant 3.200000e+01 : f32
    %283 = vector.broadcast %cst_97 : f32 to vector<16x1xf32>
    %284 = arith.divf %282, %283 : vector<16x1xf32>
    %cst_98 = arith.constant 9.99999996E-13 : f32
    %285 = vector.broadcast %cst_98 : f32 to vector<16x1xf32>
    %286 = arith.addf %284, %285 : vector<16x1xf32>
    %287 = math.rsqrt %286 : vector<16x1xf32>
    %288 = vector.broadcast %287 : vector<16x1xf32> to vector<16x32xf32>
    %289 = arith.mulf %279, %288 : vector<16x32xf32>
    %290 = vector.broadcast %272 : vector<1x32xf32> to vector<16x32xf32>
    %291 = arith.mulf %289, %290 : vector<16x32xf32>
    %292 = vector.broadcast %273 : vector<1x32xf32> to vector<16x32xf32>
    %293 = arith.addf %291, %292 : vector<16x32xf32>
    %c15_i32 = arith.constant 15 : i32
    %294 = tpu.dynamic_rotate %293 by %c15_i32 dim 0 : vector<16x32xf32>, i32 -> vector<16x32xf32>
    %295 = tpu.concatenate %293, %294 in 1 : vector<16x32xf32>, vector<16x32xf32> -> vector<16x64xf32>
    %296 = arith.truncf %295 : vector<16x64xf32> to vector<16x64xbf16>
    %c0_99 = arith.constant 0 : index
    %c0_100 = arith.constant 0 : index
    %297 = vector.load %arg3[%c0_99, %c0_100] : memref<66x256xbf16, #tpu.memory_space<vmem>>, vector<64x256xbf16>
    %cst_101 = arith.constant dense<0.000000e+00> : vector<16x256xf32>
    %298 = tpu.matmul %296, %297, %cst_101 {dimension_numbers = #tpu.dot_dimension_numbers<[1], [0], [0], [1], [0, 0, 1, 1], [], []>} : vector<16x64xbf16>, vector<64x256xbf16>, vector<16x256xf32> -> vector<16x256xf32>
    %c2 = arith.constant 2 : index
    %c0_102 = arith.constant 0 : index
    %299 = vector.load %arg4[%c2, %c0_102] : memref<20x256xf32, #tpu.memory_space<vmem>>, vector<1x256xf32>
    %300 = vector.broadcast %299 : vector<1x256xf32> to vector<16x256xf32>
    %301 = arith.addf %298, %300 : vector<16x256xf32>
    %cst_103 = arith.constant 0.000000e+00 : f32
    %302 = vector.broadcast %cst_103 : f32 to vector<16x256xf32>
    %303 = arith.maximumf %301, %302 : vector<16x256xf32>
    %304 = arith.truncf %303 : vector<16x256xf32> to vector<16x256xbf16>
    %c32 = arith.constant 32 : index
    %c0_104 = arith.constant 0 : index
    %305 = vector.load %arg1[%c32, %c0_104] : memref<36x32xf32, #tpu.memory_space<vmem>>, vector<4x16xf32>
    %306 = arith.truncf %305 : vector<4x16xf32> to vector<4x16xbf16>
    %cst_105 = arith.constant dense<0.000000e+00> : vector<4x256xf32>
    %307 = tpu.matmul %306, %304, %cst_105 {dimension_numbers = #tpu.dot_dimension_numbers<[1], [0], [0], [1], [0, 0, 1, 1], [], []>} : vector<4x16xbf16>, vector<16x256xbf16>, vector<4x256xf32> -> vector<4x256xf32>
    %c64 = arith.constant 64 : index
    %c0_106 = arith.constant 0 : index
    %308 = vector.load %arg3[%c64, %c0_106] : memref<66x256xbf16, #tpu.memory_space<vmem>>, vector<2x256xbf16>
    %309 = arith.extf %308 : vector<2x256xbf16> to vector<2x256xf32>
    %310 = vector.extract_strided_slice %307 {offsets = [0, 0], sizes = [2, 256], strides = [1, 1]} : vector<4x256xf32> to vector<2x256xf32>
    %311 = vector.extract_strided_slice %309 {offsets = [0, 0], sizes = [1, 256], strides = [1, 1]} : vector<2x256xf32> to vector<1x256xf32>
    %312 = vector.broadcast %311 : vector<1x256xf32> to vector<2x256xf32>
    %313 = arith.mulf %310, %312 : vector<2x256xf32>
    %314 = vector.extract_strided_slice %307 {offsets = [2, 0], sizes = [2, 256], strides = [1, 1]} : vector<4x256xf32> to vector<2x256xf32>
    %315 = vector.extract_strided_slice %309 {offsets = [1, 0], sizes = [1, 256], strides = [1, 1]} : vector<2x256xf32> to vector<1x256xf32>
    %316 = vector.broadcast %315 : vector<1x256xf32> to vector<2x256xf32>
    %317 = arith.mulf %314, %316 : vector<2x256xf32>
    %318 = arith.addf %313, %317 : vector<2x256xf32>
    %cst_107 = arith.constant dense<0.000000e+00> : vector<2xf32>
    %319 = vector.multi_reduction <add>, %318, %cst_107 [1] : vector<2x256xf32> to vector<2xf32>
    %320 = vector.shape_cast %319 : vector<2xf32> to vector<2x1xf32>
    %cst_108 = arith.constant 0.166666672 : f32
    %321 = vector.broadcast %cst_108 : f32 to vector<2x1xf32>
    %322 = arith.mulf %320, %321 : vector<2x1xf32>
    %c3 = arith.constant 3 : index
    %c0_109 = arith.constant 0 : index
    %323 = vector.load %arg4[%c3, %c0_109] : memref<20x256xf32, #tpu.memory_space<vmem>>, vector<1x1xf32>
    %324 = vector.broadcast %323 : vector<1x1xf32> to vector<2x1xf32>
    %325 = arith.addf %322, %324 : vector<2x1xf32>
    %c0_110 = arith.constant 0 : index
    %c0_111 = arith.constant 0 : index
    %326 = vector.load %arg5[%c0_110, %c0_111] : memref<2x1xf32, #tpu.memory_space<vmem>>, vector<2x1xf32>
    tpu.vector_store %arg5[%c0_110, %c0_111], %325 {strides = array<i32>} : memref<2x1xf32, #tpu.memory_space<vmem>>, vector<2x1xf32>,
    return
  }
}

</mosaic_0001>

<llo_original>
// kernel: bert_classifier_forward.1
$region0: #{bert_classifier_forward.1}
  #allocation0 [shape = 'u32[]', space=smem, size = 0x4, offset = 0x4, fixed_abs, tag = 'smem constant byte address 0x4 - core index']
  #allocation1 [shape = 'u32[144,128]{1,0:T(1,128)}', space=vmem, size = 0x12000, scoped, tag = 'internal scratch']
  %s0 = inlined_call_operand.vmem [shape: s32[16,2], index: 0, kind: input, shape index: {}]
  %s1 = inlined_call_operand.vmem [shape: f32[36,32], index: 1, kind: input, shape index: {}]
  %s2 = inlined_call_operand.vmem [shape: bf16[456,96], index: 2, kind: input, shape index: {}]
  %s3 = inlined_call_operand.vmem [shape: bf16[66,256], index: 3, kind: input, shape index: {}]
  %s4 = inlined_call_operand.vmem [shape: f32[20,256], index: 4, kind: input, shape index: {}]
  %s5 = inlined_call_operand.vmem [shape: f32[2,1], index: 5, kind: output, shape index: {}]
  %s6 = sld [smem:[#allocation0]]
  $region30: #{bert_classifier_forward.1} parent=0
    _
  %s8 = ssub.s32 1, %s6
  %s9 = scalar_select 0, %s8, %s6
  // Predicated region
  $region2: #{bert_classifier_forward.1} parent=0 // pred_check
    _
  $region3: #{bert_classifier_forward.1} parent=0 // pred_check_branch
    %11 = sbr.rel (0) target = $region5
  $region4: #{bert_classifier_forward.1} parent=0 // pred_region
    _
  $region5: #{bert_classifier_forward.1} parent=0 // pred_fallthru
    _
  // Predicated region
  $region6: #{bert_classifier_forward.1} parent=0 // pred_check
    _
  $region7: #{bert_classifier_forward.1} parent=0 // pred_check_branch
    %13 = sbr.rel (0) target = $region9
  $region8: #{bert_classifier_forward.1} parent=0 // pred_region
    _
  $region9: #{bert_classifier_forward.1} parent=0 // pred_fallthru
    _
  // Predicated region
  $region10: #{bert_classifier_forward.1} parent=0 // pred_check
    _
  $region11: #{bert_classifier_forward.1} parent=0 // pred_check_branch
    %15 = sbr.rel (0) target = $region13
  $region12: #{bert_classifier_forward.1} parent=0 // pred_region
    _
  $region13: #{bert_classifier_forward.1} parent=0 // pred_fallthru
    _
  // Predicated region
  $region14: #{bert_classifier_forward.1} parent=0 // pred_check
    _
  $region15: #{bert_classifier_forward.1} parent=0 // pred_check_branch
    %17 = sbr.rel (0) target = $region17
  $region16: #{bert_classifier_forward.1} parent=0 // pred_region
    _
  $region17: #{bert_classifier_forward.1} parent=0 // pred_fallthru
    _
  // Predicated region
  $region18: #{bert_classifier_forward.1} parent=0 // pred_check
    _
  $region19: #{bert_classifier_forward.1} parent=0 // pred_check_branch
    %19 = sbr.rel (0) target = $region21
  $region20: #{bert_classifier_forward.1} parent=0 // pred_region
    _
  $region21: #{bert_classifier_forward.1} parent=0 // pred_fallthru
    _
  %v21 = vld [vmem:[%s0] sm:$0xff]
  %v22 = vld [vmem:[%s0 + $0x8] sm:$0xff]
  %v23 = vlaneseq
  %v24 = vand.u32 %v23, 127
  %v25 = vadd.s32 %v24, 128
  %26 = vset.pattern.permute.xlu0 0
  %27 = vperm.xlu0 %26, %v21
  %v28 = vpop.permute.xlu0 %27
  %29 = vset.pattern.permute.xlu0 0
  %30 = vperm.xlu0 %29, %v22
  %v31 = vpop.permute.xlu0 %30
  %vm32 = vcmp.eq.s32.totalorder %v24, %v28
  %vm33 = vcmp.eq.s32.totalorder %v25, %v28
  %vm34 = vcmp.eq.s32.totalorder %v24, %v31
  %vm35 = vcmp.eq.s32.totalorder %v25, %v31
  %vm36 = vcmp.lt.s32.totalorder %v24, 128
  %vm37 = vcmp.lt.s32.totalorder %v25, 128
  %vm38 = vmand %vm32, %vm36
  %vm39 = vmand %vm33, %vm37
  %vm40 = vmand %vm34, %vm36
  %vm41 = vmand %vm35, %vm37
  %v42 = vsub.s32 %v24, 128
  %43 = vset.pattern.permute.xlu0 1
  %44 = vperm.xlu0 %43, %v21
  %v45 = vpop.permute.xlu0 %44
  %46 = vset.pattern.permute.xlu0 1
  %47 = vperm.xlu0 %46, %v22
  %v48 = vpop.permute.xlu0 %47
  %vm49 = vcmp.eq.s32.totalorder %v42, %v45
  %vm50 = vcmp.eq.s32.totalorder %v24, %v45
  %vm51 = vcmp.eq.s32.totalorder %v42, %v48
  %vm52 = vcmp.eq.s32.totalorder %v24, %v48
  %vm53 = vcmp.ge.s32.totalorder %v24, 128
  %vm54 = vcmp.ge.s32.totalorder %v25, 128
  %vm55 = vmand %vm49, %vm53
  %vm56 = vmand %vm50, %vm54
  %vm57 = vmand %vm51, %vm53
  %vm58 = vmand %vm52, %vm54
  %vm59 = vmor %vm38, %vm55
  %vm60 = vmor %vm39, %vm56
  %vm61 = vmor %vm40, %vm57
  %vm62 = vmor %vm41, %vm58
  %v63 = vsel %vm59, 1, 0
  %v64 = vsel %vm60, 1, 0
  %v65 = vsel %vm61, 1, 0
  %v66 = vsel %vm62, 1, 0
  %v67 = vcvt.s32.f32 %v63
  %v68 = vcvt.s32.f32 %v64
  %v69 = vcvt.s32.f32 %v65
  %v70 = vcvt.s32.f32 %v66
  %v71 = vpack.c.bf16 %v69, %v67
  %v72 = vpack.c.bf16 %v70, %v68
  %v73 = vld [vmem:[%s2] sm:$0xf]
  %v74 = vld [vmem:[%s2 + $0x4] sm:$0xf]
  %v75 = vld [vmem:[%s2 + $0x8] sm:$0xf]
  %v76 = vld [vmem:[%s2 + $0xc] sm:$0xf]
  %v77 = vld [vmem:[%s2 + $0x10] sm:$0xf]
  %v78 = vld [vmem:[%s2 + $0x14] sm:$0xf]
  %v79 = vld [vmem:[%s2 + $0x18] sm:$0xf]
  %v80 = vld [vmem:[%s2 + $0x1c] sm:$0xf]
  %v81 = vld [vmem:[%s2 + $0x20] sm:$0xf]
  %v82 = vld [vmem:[%s2 + $0x24] sm:$0xf]
  %v83 = vld [vmem:[%s2 + $0x28] sm:$0xf]
  %v84 = vld [vmem:[%s2 + $0x2c] sm:$0xf]
  %v85 = vld [vmem:[%s2 + $0x30] sm:$0xf]
  %v86 = vld [vmem:[%s2 + $0x34] sm:$0xf]
  %v87 = vld [vmem:[%s2 + $0x38] sm:$0xf]
  %v88 = vld [vmem:[%s2 + $0x3c] sm:$0xf]
  %v89 = vld [vmem:[%s2 + $0x40] sm:$0xf]
  %v90 = vld [vmem:[%s1] sm:$0xff]
  %v91 = vld [vmem:[%s1 + $0x8] sm:$0xff]
  %v109 = vunpack.c.l.b16 %v73
  %v110 = vunpack.c.l.b16 %v74
  %v111 = vunpack.c.l.b16 %v75
  %v112 = vunpack.c.l.b16 %v76
  %v113 = vunpack.c.l.b16 %v77
  %v114 = vunpack.c.l.b16 %v78
  %v115 = vunpack.c.l.b16 %v79
  %v116 = vunpack.c.l.b16 %v80
  %v117 = vunpack.c.l.b16 %v81
  %v118 = vunpack.c.l.b16 %v82
  %v119 = vunpack.c.l.b16 %v83
  %v120 = vunpack.c.l.b16 %v84
  %v121 = vunpack.c.l.b16 %v85
  %v122 = vunpack.c.l.b16 %v86
  %v123 = vunpack.c.l.b16 %v87
  %v124 = vunpack.c.l.b16 %v88
  %v125 = vunpack.c.l.b16 %v89
  %v126 = vpack.c.b16 %v110, %v109
  %v127 = vpack.c.b16 %v112, %v111
  %v128 = vpack.c.b16 %v114, %v113
  %v129 = vpack.c.b16 %v116, %v115
  %v130 = vpack.c.b16 %v118, %v117
  %v131 = vpack.c.b16 %v120, %v119
  %v132 = vpack.c.b16 %v122, %v121
  %v133 = vpack.c.b16 %v124, %v123
  %v134 = vpack.c.b16 %v125, %v125
  %vm143 = vcmask 64512
  %v145 = vsel %vm143, %v72, 0
  %vm147 = vcmask 1043456
  %v149 = vsel %vm147, %v134, 0
  %151 = vmatprep.subr.bf16.mxu0 0
  %152 = vmatpush1.bf16.msra.mxu0 %v133
  %153 = vmatprep.subr.bf16.mxu0 0
  %154 = vmatpush1.bf16.msra.mxu0 %v132
  %155 = vmatprep.subr.bf16.mxu0 0
  %156 = vmatpush1.bf16.msra.mxu0 %v131
  %157 = vmatprep.subr.bf16.mxu0 0
  %158 = vmatpush1.bf16.msra.mxu0 %v130
  %159 = vmatprep.subr.bf16.mxu0 0
  %160 = vmatpush1.bf16.msra.mxu0 %v129
  %161 = vmatprep.subr.bf16.mxu0 0
  %162 = vmatpush1.bf16.msra.mxu0 %v128
  %163 = vmatprep.subr.bf16.mxu0 0
  %164 = vmatpush1.bf16.msra.mxu0 %v127
  %165 = vmatprep.subr.bf16.mxu0 0
  %166 = vmatpush1.bf16.msra.mxu0 %v126
  %167 = vmatprep.subr.bf16.mxu0 0
  %168 = vmatpush2.bf16.msra.mxu0 0
  %169 = vmatprep.subr.bf16.mxu0 0
  %170 = vmatpush2.bf16.msra.mxu0 0
  %171 = vmatprep.subr.bf16.mxu0 0
  %172 = vmatpush2.bf16.msra.mxu0 0
  %173 = vmatprep.subr.bf16.mxu0 0
  %174 = vmatpush2.bf16.msra.mxu0 0
  %175 = vmatprep.subr.bf16.mxu0 0
  %176 = vmatpush2.bf16.msra.mxu0 0
  %177 = vmatprep.subr.bf16.mxu0 0
  %178 = vmatpush2.bf16.msra.mxu0 0
  %179 = vmatprep.subr.bf16.mxu0 0
  %180 = vmatpush2.bf16.msra.mxu0 0
  %181 = vmatprep.subr.bf16.mxu0 0
  %182 = vmatpush2.bf16.msra.mxu0 %v149
  %183 = vmatprep.mubr.bf16.mxu0 %v145
  %184 = vmatmul.mubr.bf16.gmra.mxu0 %v71
  %v185 = vpop.f32.mrf.mxu0
  %v186 = vadd.f32 %v90, %v185
  %v187 = vpop.f32.mrf.mxu0
  %v188 = vpop.f32.mrf.mxu0
  %v189 = vadd.f32 %v91, %v188
  %v190 = vpop.f32.mrf.mxu0
  %191 = vdwg.mxu0
  %v192 = vld [vmem:[%s4] ss:$0 sm:$0xff]
  %v193 = vld [vmem:[%s4 + $0x1] ss:$0 sm:$0xff]
  %vm194 = vcmask 261120
  %v195 = vsel %vm194, %v186, 0.0
  %196 = vadd.xlane.f32.xlu0 %v195
  %v197 = vpop.xlane.xlu0 %196
  %v198 = vsel %vm194, %v189, 0.0
  %199 = vadd.xlane.f32.xlu0 %v198
  %v200 = vpop.xlane.xlu0 %199
  %v201 = vrcp.pop 32.0
  %v202 = vmul.f32 %v197, %v201
  %v203 = vmul.f32 %v200, %v201
  %v204 = vsub.f32 %v186, %v202
  %v205 = vsub.f32 %v189, %v203
  %v206 = vmul.f32 %v204, %v204
  %v207 = vmul.f32 %v205, %v205
  %v208 = vsel %vm194, %v206, 0.0
  %209 = vadd.xlane.f32.xlu0 %v208
  %v210 = vpop.xlane.xlu0 %209
  %v211 = vsel %vm194, %v207, 0.0
  %212 = vadd.xlane.f32.xlu0 %v211
  %v213 = vpop.xlane.xlu0 %212
  %v214 = vmul.f32 %v210, %v201
  %v215 = vmul.f32 %v213, %v201
  %v216 = vadd.f32 %v214, 1e-12
  %v217 = vadd.f32 %v215, 1e-12
  %v218 = vrsqrt.pop %v216
  %v219 = vrsqrt.pop %v217
  %v220 = vmul.f32 %v204, %v218
  %v221 = vmul.f32 %v205, %v219
  %v222 = vmul.f32 %v220, %v192
  %v223 = vmul.f32 %v221, %v192
  %v224 = vadd.f32 %v222, %v193
  %v225 = vadd.f32 %v223, %v193
  %v226 = vld [vmem:[%s1 + $0x10] sm:$0xff]
  %v227 = vld [vmem:[%s1 + $0x18] sm:$0xff]
  %v228 = vpack.c.bf16 %v225, %v224
  %v229 = vld [vmem:[%s2 + $0x44] sm:$0xf]
  %v230 = vld [vmem:[%s2 + $0x48] sm:$0xf]
  %v231 = vld [vmem:[%s2 + $0x4c] sm:$0xf]
  %v232 = vld [vmem:[%s2 + $0x50] sm:$0xf]
  %v233 = vld [vmem:[%s4 + $0x4] ss:$0 sm:$0xff]
  %v238 = vunpack.c.l.b16 %v229
  %v239 = vunpack.c.l.b16 %v230
  %v240 = vunpack.c.l.b16 %v231
  %v241 = vunpack.c.l.b16 %v232
  %v242 = vpack.c.b16 %v239, %v238
  %v243 = vpack.c.b16 %v241, %v240
  %v247 = vsel %vm194, %v228, 0
  %249 = vmatprep.subr.bf16.mxu0 0
  %250 = vmatpush1.bf16.msra.mxu0 0
  %251 = vmatprep.subr.bf16.mxu0 0
  %252 = vmatpush1.bf16.msra.mxu0 0
  %253 = vmatprep.subr.bf16.mxu0 0
  %254 = vmatpush1.bf16.msra.mxu0 0
  %255 = vmatprep.subr.bf16.mxu0 0
  %256 = vmatpush1.bf16.msra.mxu0 0
  %257 = vmatprep.subr.bf16.mxu0 0
  %258 = vmatpush1.bf16.msra.mxu0 0
  %259 = vmatprep.subr.bf16.mxu0 0
  %260 = vmatpush1.bf16.msra.mxu0 0
  %261 = vmatprep.subr.bf16.mxu0 0
  %262 = vmatpush1.bf16.msra.mxu0 %v243
  %263 = vmatprep.subr.bf16.mxu0 0
  %264 = vmatpush1.bf16.msra.mxu0 %v242
  %265 = vmatprep.subr.bf16.mxu0 0
  %266 = vmatpush2.bf16.msra.mxu0 0
  %267 = vmatprep.subr.bf16.mxu0 0
  %268 = vmatpush2.bf16.msra.mxu0 0
  %269 = vmatprep.subr.bf16.mxu0 0
  %270 = vmatpush2.bf16.msra.mxu0 0
  %271 = vmatprep.subr.bf16.mxu0 0
  %272 = vmatpush2.bf16.msra.mxu0 0
  %273 = vmatprep.subr.bf16.mxu0 0
  %274 = vmatpush2.bf16.msra.mxu0 0
  %275 = vmatprep.subr.bf16.mxu0 0
  %276 = vmatpush2.bf16.msra.mxu0 0
  %277 = vmatprep.subr.bf16.mxu0 0
  %278 = vmatpush2.bf16.msra.mxu0 0
  %279 = vmatprep.subr.bf16.mxu0 0
  %280 = vmatpush2.bf16.msra.mxu0 0
  %281 = vmatprep.mubr.bf16.mxu0 0
  %282 = vmatmul.mubr.bf16.gmra.mxu0 %v247
  %v283 = vpop.f32.mrf.mxu0
  %v284 = vadd.f32 %v233, %v283
  %v285 = vpop.f32.mrf.mxu0
  %v286 = vpop.f32.mrf.mxu0
  %v287 = vadd.f32 %v233, %v286
  %v288 = vpop.f32.mrf.mxu0
  %289 = vdwg.mxu0
  %292 = vrot.lane.b32.xlu0 %v284, 96
  %v293 = vpop.permute.xlu0 %292
  %294 = vrot.lane.b32.xlu0 %v287, 96
  %v295 = vpop.permute.xlu0 %294
  %vm296 = vcmask 130048
  %v297 = vsel %vm296, %v284, 0
  %v299 = vsel %vm296, %v287, 0
  %v301 = vsel %vm296, %v293, 0
  %v303 = vsel %vm296, %v295, 0
  %305 = vmatprep.subr.mxu0 0.0
  %306 = vmatpush1.xpose.msra.mxu0 0.0
  %307 = vmatprep.subr.mxu0 0.0
  %308 = vmatpush1.xpose.msra.mxu0 0.0
  %309 = vmatprep.subr.mxu0 0.0
  %310 = vmatpush1.xpose.msra.mxu0 0.0
  %311 = vmatprep.subr.mxu0 0.0
  %312 = vmatpush1.xpose.msra.mxu0 0.0
  %313 = vmatprep.subr.mxu0 0.0
  %314 = vmatpush1.xpose.msra.mxu0 0.0
  %315 = vmatprep.subr.mxu0 0.0
  %316 = vmatpush1.xpose.msra.mxu0 0.0
  %317 = vmatprep.subr.mxu0 0.0
  %318 = vmatpush1.xpose.msra.mxu0 0.0
  %319 = vmatprep.subr.mxu0 0.0
  %320 = vmatpush1.xpose.msra.mxu0 0.0
  %321 = vmatprep.subr.mxu0 0.0
  %322 = vmatpush1.xpose.msra.mxu0 0.0
  %323 = vmatprep.subr.mxu0 0.0
  %324 = vmatpush1.xpose.msra.mxu0 0.0
  %325 = vmatprep.subr.mxu0 0.0
  %326 = vmatpush1.xpose.msra.mxu0 0.0
  %327 = vmatprep.subr.mxu0 0.0
  %328 = vmatpush1.xpose.msra.mxu0 0.0
  %329 = vmatprep.subr.mxu0 0.0
  %330 = vmatpush1.xpose.msra.mxu0 0.0
  %331 = vmatprep.subr.mxu0 0.0
  %332 = vmatpush1.xpose.msra.mxu0 0.0
  %333 = vmatprep.subr.mxu0 0.0
  %334 = vmatpush1.xpose.msra.mxu0 %v303
  %335 = vmatprep.subr.mxu0 0.0
  %336 = vmatpush1.xpose.msra.mxu0 %v301
  %337 = vmatprep.subr.mxu0 0.0
  %338 = vmatpush2.xpose.msra.mxu0 0.0
  %339 = vmatprep.subr.mxu0 0.0
  %340 = vmatpush2.xpose.msra.mxu0 0.0
  %341 = vmatprep.subr.mxu0 0.0
  %342 = vmatpush2.xpose.msra.mxu0 0.0
  %343 = vmatprep.subr.mxu0 0.0
  %344 = vmatpush2.xpose.msra.mxu0 0.0
  %345 = vmatprep.subr.mxu0 0.0
  %346 = vmatpush2.xpose.msra.mxu0 0.0
  %347 = vmatprep.subr.mxu0 0.0
  %348 = vmatpush2.xpose.msra.mxu0 0.0
  %349 = vmatprep.subr.mxu0 0.0
  %350 = vmatpush2.xpose.msra.mxu0 0.0
  %351 = vmatprep.subr.mxu0 0.0
  %352 = vmatpush2.xpose.msra.mxu0 0.0
  %353 = vmatprep.subr.mxu0 0.0
  %354 = vmatpush2.xpose.msra.mxu0 0.0
  %355 = vmatprep.subr.mxu0 0.0
  %356 = vmatpush2.xpose.msra.mxu0 0.0
  %357 = vmatprep.subr.mxu0 0.0
  %358 = vmatpush2.xpose.msra.mxu0 0.0
  %359 = vmatprep.subr.mxu0 0.0
  %360 = vmatpush2.xpose.msra.mxu0 0.0
  %361 = vmatprep.subr.mxu0 0.0
  %362 = vmatpush2.xpose.msra.mxu0 0.0
  %363 = vmatprep.subr.mxu0 0.0
  %364 = vmatpush2.xpose.msra.mxu0 0.0
  %365 = vmatprep.subr.mxu0 0.0
  %366 = vmatpush2.xpose.msra.mxu0 0.0
  %367 = vmatprep.subr.mxu0 0.0
  %368 = vmatpush2.xpose.msra.mxu0 0.0
  %369 = vmatprep.mubr.f32.mxu0 0.0
  %370 = vmatmul.mubr.f32.gmra.mxu0 %v297
  %v371 = vpop.f32.mrf.mxu0
  %v372 = vadd.f32 0.0, %v371
  %v373 = vpop.f32.mrf.mxu0
  %374 = vmatprep.mubr.f32.mxu0 0.0
  %375 = vmatmul.mubr.f32.gmra.mxu0 %v299
  %v376 = vpop.f32.mrf.mxu0
  %v377 = vadd.f32 0.0, %v376
  %v378 = vpop.f32.mrf.mxu0
  %379 = vdwg.mxu0
  %v380 = vmul.f32 %v372, 0.25
  %v381 = vmul.f32 %v377, 0.25
  %v382 = vadd.f32 %v380, %v226
  %v383 = vadd.f32 %v381, %v227
  %384 = vrot.lane.b32.xlu0 %v284, 112
  %v385 = vpop.permute.xlu0 %384
  %386 = vrot.lane.b32.xlu0 %v287, 112
  %v387 = vpop.permute.xlu0 %386
  %388 = vrot.lane.b32.xlu0 %v284, 80
  %v389 = vpop.permute.xlu0 %388
  %390 = vrot.lane.b32.xlu0 %v287, 80
  %v391 = vpop.permute.xlu0 %390
  %v392 = vsel %vm296, %v385, 0
  %v394 = vsel %vm296, %v387, 0
  %v396 = vsel %vm296, %v389, 0
  %v398 = vsel %vm296, %v391, 0
  %400 = vmatprep.subr.mxu0 0.0
  %401 = vmatpush1.xpose.msra.mxu0 0.0
  %402 = vmatprep.subr.mxu0 0.0
  %403 = vmatpush1.xpose.msra.mxu0 0.0
  %404 = vmatprep.subr.mxu0 0.0
  %405 = vmatpush1.xpose.msra.mxu0 0.0
  %406 = vmatprep.subr.mxu0 0.0
  %407 = vmatpush1.xpose.msra.mxu0 0.0
  %408 = vmatprep.subr.mxu0 0.0
  %409 = vmatpush1.xpose.msra.mxu0 0.0
  %410 = vmatprep.subr.mxu0 0.0
  %411 = vmatpush1.xpose.msra.mxu0 0.0
  %412 = vmatprep.subr.mxu0 0.0
  %413 = vmatpush1.xpose.msra.mxu0 0.0
  %414 = vmatprep.subr.mxu0 0.0
  %415 = vmatpush1.xpose.msra.mxu0 0.0
  %416 = vmatprep.subr.mxu0 0.0
  %417 = vmatpush1.xpose.msra.mxu0 0.0
  %418 = vmatprep.subr.mxu0 0.0
  %419 = vmatpush1.xpose.msra.mxu0 0.0
  %420 = vmatprep.subr.mxu0 0.0
  %421 = vmatpush1.xpose.msra.mxu0 0.0
  %422 = vmatprep.subr.mxu0 0.0
  %423 = vmatpush1.xpose.msra.mxu0 0.0
  %424 = vmatprep.subr.mxu0 0.0
  %425 = vmatpush1.xpose.msra.mxu0 0.0
  %426 = vmatprep.subr.mxu0 0.0
  %427 = vmatpush1.xpose.msra.mxu0 0.0
  %428 = vmatprep.subr.mxu0 0.0
  %429 = vmatpush1.xpose.msra.mxu0 %v398
  %430 = vmatprep.subr.mxu0 0.0
  %431 = vmatpush1.xpose.msra.mxu0 %v396
  %432 = vmatprep.subr.mxu0 0.0
  %433 = vmatpush2.xpose.msra.mxu0 0.0
  %434 = vmatprep.subr.mxu0 0.0
  %435 = vmatpush2.xpose.msra.mxu0 0.0
  %436 = vmatprep.subr.mxu0 0.0
  %437 = vmatpush2.xpose.msra.mxu0 0.0
  %438 = vmatprep.subr.mxu0 0.0
  %439 = vmatpush2.xpose.msra.mxu0 0.0
  %440 = vmatprep.subr.mxu0 0.0
  %441 = vmatpush2.xpose.msra.mxu0 0.0
  %442 = vmatprep.subr.mxu0 0.0
  %443 = vmatpush2.xpose.msra.mxu0 0.0
  %444 = vmatprep.subr.mxu0 0.0
  %445 = vmatpush2.xpose.msra.mxu0 0.0
  %446 = vmatprep.subr.mxu0 0.0
  %447 = vmatpush2.xpose.msra.mxu0 0.0
  %448 = vmatprep.subr.mxu0 0.0
  %449 = vmatpush2.xpose.msra.mxu0 0.0
  %450 = vmatprep.subr.mxu0 0.0
  %451 = vmatpush2.xpose.msra.mxu0 0.0
  %452 = vmatprep.subr.mxu0 0.0
  %453 = vmatpush2.xpose.msra.mxu0 0.0
  %454 = vmatprep.subr.mxu0 0.0
  %455 = vmatpush2.xpose.msra.mxu0 0.0
  %456 = vmatprep.subr.mxu0 0.0
  %457 = vmatpush2.xpose.msra.mxu0 0.0
  %458 = vmatprep.subr.mxu0 0.0
  %459 = vmatpush2.xpose.msra.mxu0 0.0
  %460 = vmatprep.subr.mxu0 0.0
  %461 = vmatpush2.xpose.msra.mxu0 0.0
  %462 = vmatprep.subr.mxu0 0.0
  %463 = vmatpush2.xpose.msra.mxu0 0.0
  %464 = vmatprep.mubr.f32.mxu0 0.0
  %465 = vmatmul.mubr.f32.gmra.mxu0 %v392
  %v466 = vpop.f32.mrf.mxu0
  %v467 = vadd.f32 0.0, %v466
  %v468 = vpop.f32.mrf.mxu0
  %469 = vmatprep.mubr.f32.mxu0 0.0
  %470 = vmatmul.mubr.f32.gmra.mxu0 %v394
  %v471 = vpop.f32.mrf.mxu0
  %v472 = vadd.f32 0.0, %v471
  %v473 = vpop.f32.mrf.mxu0
  %474 = vdwg.mxu0
  %v475 = vmul.f32 %v467, 0.25
  %v476 = vmul.f32 %v472, 0.25
  %v477 = vadd.f32 %v475, %v226
  %v478 = vadd.f32 %v476, %v227
  %v479 = vsel %vm296, %v382, -inf
  %480 = vmax.xlane.f32.xlu0 %v479
  %v481 = vpop.xlane.xlu0 %480
  %v482 = vsel %vm296, %v383, -inf
  %483 = vmax.xlane.f32.xlu0 %v482
  %v484 = vpop.xlane.xlu0 %483
  %v485 = vsub.f32 %v382, %v481
  %v486 = vsub.f32 %v383, %v484
  %v487 = vmul.f32 %v485, 1.442695
  %v488 = vpow.pop %v487
  %v489 = vmul.f32 %v486, 1.442695
  %v490 = vpow.pop %v489
  %v491 = vsel %vm296, %v488, 0.0
  %492 = vadd.xlane.f32.xlu0 %v491
  %v493 = vpop.xlane.xlu0 %492
  %v494 = vsel %vm296, %v490, 0.0
  %495 = vadd.xlane.f32.xlu0 %v494
  %v496 = vpop.xlane.xlu0 %495
  %v497 = vrcp.pop %v493
  %v498 = vrcp.pop %v496
  %v499 = vmul.f32 %v488, %v497
  %v500 = vmul.f32 %v490, %v498
  %v501 = vpack.c.bf16 %v287, %v284
  %v502 = vpack.c.bf16 %v500, %v499
  %504 = vrot.lane.b32.xlu0 %v501, 64
  %v505 = vpop.permute.xlu0 %504
  %v508 = vsel %vm296, %v502, 0
  %510 = vmatprep.subr.bf16.mxu0 0
  %511 = vmatpush1.bf16.msra.mxu0 0
  %512 = vmatprep.subr.bf16.mxu0 0
  %513 = vmatpush1.bf16.msra.mxu0 0
  %514 = vmatprep.subr.bf16.mxu0 0
  %515 = vmatpush1.bf16.msra.mxu0 0
  %516 = vmatprep.subr.bf16.mxu0 0
  %517 = vmatpush1.bf16.msra.mxu0 0
  %518 = vmatprep.subr.bf16.mxu0 0
  %519 = vmatpush1.bf16.msra.mxu0 0
  %520 = vmatprep.subr.bf16.mxu0 0
  %521 = vmatpush1.bf16.msra.mxu0 0
  %522 = vmatprep.subr.bf16.mxu0 0
  %523 = vmatpush1.bf16.msra.mxu0 0
  %524 = vmatprep.subr.bf16.mxu0 0
  %525 = vmatpush1.bf16.msra.mxu0 %v505
  %526 = vmatprep.subr.bf16.mxu0 0
  %527 = vmatpush2.bf16.msra.mxu0 0
  %528 = vmatprep.subr.bf16.mxu0 0
  %529 = vmatpush2.bf16.msra.mxu0 0
  %530 = vmatprep.subr.bf16.mxu0 0
  %531 = vmatpush2.bf16.msra.mxu0 0
  %532 = vmatprep.subr.bf16.mxu0 0
  %533 = vmatpush2.bf16.msra.mxu0 0
  %534 = vmatprep.subr.bf16.mxu0 0
  %535 = vmatpush2.bf16.msra.mxu0 0
  %536 = vmatprep.subr.bf16.mxu0 0
  %537 = vmatpush2.bf16.msra.mxu0 0
  %538 = vmatprep.subr.bf16.mxu0 0
  %539 = vmatpush2.bf16.msra.mxu0 0
  %540 = vmatprep.subr.bf16.mxu0 0
  %541 = vmatpush2.bf16.msra.mxu0 0
  %542 = vmatprep.mubr.bf16.mxu0 0
  %543 = vmatmul.mubr.bf16.gmra.mxu0 %v508
  %v544 = vpop.f32.mrf.mxu0
  %v545 = vadd.f32 0.0, %v544
  %v546 = vpop.f32.mrf.mxu0
  %v547 = vpop.f32.mrf.mxu0
  %v548 = vadd.f32 0.0, %v547
  %v549 = vpop.f32.mrf.mxu0
  %550 = vdwg.mxu0
  %v551 = vsel %vm296, %v477, -inf
  %552 = vmax.xlane.f32.xlu0 %v551
  %v553 = vpop.xlane.xlu0 %552
  %v554 = vsel %vm296, %v478, -inf
  %555 = vmax.xlane.f32.xlu0 %v554
  %v556 = vpop.xlane.xlu0 %555
  %v557 = vsub.f32 %v477, %v553
  %v558 = vsub.f32 %v478, %v556
  %v559 = vmul.f32 %v557, 1.442695
  %v560 = vpow.pop %v559
  %v561 = vmul.f32 %v558, 1.442695
  %v562 = vpow.pop %v561
  %v563 = vsel %vm296, %v560, 0.0
  %564 = vadd.xlane.f32.xlu0 %v563
  %v565 = vpop.xlane.xlu0 %564
  %v566 = vsel %vm296, %v562, 0.0
  %567 = vadd.xlane.f32.xlu0 %v566
  %v568 = vpop.xlane.xlu0 %567
  %v569 = vrcp.pop %v565
  %v570 = vrcp.pop %v568
  %v571 = vmul.f32 %v560, %v569
  %v572 = vmul.f32 %v562, %v570
  %v573 = vpack.c.bf16 %v572, %v571
  %574 = vrot.lane.b32.xlu0 %v501, 48
  %v575 = vpop.permute.xlu0 %574
  %v578 = vsel %vm296, %v573, 0
  %580 = vmatprep.subr.bf16.mxu0 0
  %581 = vmatpush1.bf16.msra.mxu0 0
  %582 = vmatprep.subr.bf16.mxu0 0
  %583 = vmatpush1.bf16.msra.mxu0 0
  %584 = vmatprep.subr.bf16.mxu0 0
  %585 = vmatpush1.bf16.msra.mxu0 0
  %586 = vmatprep.subr.bf16.mxu0 0
  %587 = vmatpush1.bf16.msra.mxu0 0
  %588 = vmatprep.subr.bf16.mxu0 0
  %589 = vmatpush1.bf16.msra.mxu0 0
  %590 = vmatprep.subr.bf16.mxu0 0
  %591 = vmatpush1.bf16.msra.mxu0 0
  %592 = vmatprep.subr.bf16.mxu0 0
  %593 = vmatpush1.bf16.msra.mxu0 0
  %594 = vmatprep.subr.bf16.mxu0 0
  %595 = vmatpush1.bf16.msra.mxu0 %v575
  %596 = vmatprep.subr.bf16.mxu0 0
  %597 = vmatpush2.bf16.msra.mxu0 0
  %598 = vmatprep.subr.bf16.mxu0 0
  %599 = vmatpush2.bf16.msra.mxu0 0
  %600 = vmatprep.subr.bf16.mxu0 0
  %601 = vmatpush2.bf16.msra.mxu0 0
  %602 = vmatprep.subr.bf16.mxu0 0
  %603 = vmatpush2.bf16.msra.mxu0 0
  %604 = vmatprep.subr.bf16.mxu0 0
  %605 = vmatpush2.bf16.msra.mxu0 0
  %606 = vmatprep.subr.bf16.mxu0 0
  %607 = vmatpush2.bf16.msra.mxu0 0
  %608 = vmatprep.subr.bf16.mxu0 0
  %609 = vmatpush2.bf16.msra.mxu0 0
  %610 = vmatprep.subr.bf16.mxu0 0
  %611 = vmatpush2.bf16.msra.mxu0 0
  %612 = vmatprep.mubr.bf16.mxu0 0
  %613 = vmatmul.mubr.bf16.gmra.mxu0 %v578
  %v614 = vpop.f32.mrf.mxu0
  %v615 = vadd.f32 0.0, %v614
  %v616 = vpop.f32.mrf.mxu0
  %v617 = vpop.f32.mrf.mxu0
  %v618 = vadd.f32 0.0, %v617
  %v619 = vpop.f32.mrf.mxu0
  %620 = vdwg.mxu0
  %623 = vrot.lane.b32.xlu0 %v615, 16
  %v624 = vpop.permute.xlu0 %623
  %625 = vrot.lane.b32.xlu0 %v618, 16
  %v626 = vpop.permute.xlu0 %625
  %v629 = vsel %vm296, %v545, %v624
  %v630 = vsel %vm296, %v548, %v626
  %v631 = vpack.c.bf16 %v630, %v629
  %v632 = vld [vmem:[%s2 + $0x54] sm:$0xf]
  %v633 = vld [vmem:[%s2 + $0x58] sm:$0xf]
  %v634 = vld [vmem:[%s2 + $0x5c] sm:$0xf]
  %v635 = vld [vmem:[%s2 + $0x60] sm:$0xf]
  %v636 = vld [vmem:[%s4 + $0x5] ss:$0 sm:$0xff]
  %v641 = vunpack.c.l.b16 %v632
  %v642 = vunpack.c.l.b16 %v633
  %v643 = vunpack.c.l.b16 %v634
  %v644 = vunpack.c.l.b16 %v635
  %v645 = vpack.c.b16 %v642, %v641
  %v646 = vpack.c.b16 %v644, %v643
  %v650 = vsel %vm194, %v631, 0
  %652 = vmatprep.subr.bf16.mxu0 0
  %653 = vmatpush1.bf16.msra.mxu0 0
  %654 = vmatprep.subr.bf16.mxu0 0
  %655 = vmatpush1.bf16.msra.mxu0 0
  %656 = vmatprep.subr.bf16.mxu0 0
  %657 = vmatpush1.bf16.msra.mxu0 0
  %658 = vmatprep.subr.bf16.mxu0 0
  %659 = vmatpush1.bf16.msra.mxu0 0
  %660 = vmatprep.subr.bf16.mxu0 0
  %661 = vmatpush1.bf16.msra.mxu0 0
  %662 = vmatprep.subr.bf16.mxu0 0
  %663 = vmatpush1.bf16.msra.mxu0 0
  %664 = vmatprep.subr.bf16.mxu0 0
  %665 = vmatpush1.bf16.msra.mxu0 %v646
  %666 = vmatprep.subr.bf16.mxu0 0
  %667 = vmatpush1.bf16.msra.mxu0 %v645
  %668 = vmatprep.subr.bf16.mxu0 0
  %669 = vmatpush2.bf16.msra.mxu0 0
  %670 = vmatprep.subr.bf16.mxu0 0
  %671 = vmatpush2.bf16.msra.mxu0 0
  %672 = vmatprep.subr.bf16.mxu0 0
  %673 = vmatpush2.bf16.msra.mxu0 0
  %674 = vmatprep.subr.bf16.mxu0 0
  %675 = vmatpush2.bf16.msra.mxu0 0
  %676 = vmatprep.subr.bf16.mxu0 0
  %677 = vmatpush2.bf16.msra.mxu0 0
  %678 = vmatprep.subr.bf16.mxu0 0
  %679 = vmatpush2.bf16.msra.mxu0 0
  %680 = vmatprep.subr.bf16.mxu0 0
  %681 = vmatpush2.bf16.msra.mxu0 0
  %682 = vmatprep.subr.bf16.mxu0 0
  %683 = vmatpush2.bf16.msra.mxu0 0
  %684 = vmatprep.mubr.bf16.mxu0 0
  %685 = vmatmul.mubr.bf16.gmra.mxu0 %v650
  %v686 = vpop.f32.mrf.mxu0
  %v687 = vadd.f32 %v636, %v686
  %v688 = vpop.f32.mrf.mxu0
  %v689 = vpop.f32.mrf.mxu0
  %v690 = vadd.f32 %v636, %v689
  %v691 = vpop.f32.mrf.mxu0
  %692 = vdwg.mxu0
  %v693 = vadd.f32 %v224, %v687
  %v694 = vadd.f32 %v225, %v690
  %v695 = vld [vmem:[%s4 + $0x6] ss:$0 sm:$0xff]
  %v696 = vld [vmem:[%s4 + $0x7] ss:$0 sm:$0xff]
  %v697 = vsel %vm194, %v693, 0.0
  %698 = vadd.xlane.f32.xlu0 %v697
  %v699 = vpop.xlane.xlu0 %698
  %v700 = vsel %vm194, %v694, 0.0
  %701 = vadd.xlane.f32.xlu0 %v700
  %v702 = vpop.xlane.xlu0 %701
  %v703 = vmul.f32 %v699, %v201
  %v704 = vmul.f32 %v702, %v201
  %v705 = vsub.f32 %v693, %v703
  %v706 = vsub.f32 %v694, %v704
  %v707 = vmul.f32 %v705, %v705
  %v708 = vmul.f32 %v706, %v706
  %v709 = vsel %vm194, %v707, 0.0
  %710 = vadd.xlane.f32.xlu0 %v709
  %v711 = vpop.xlane.xlu0 %710
  %v712 = vsel %vm194, %v708, 0.0
  %713 = vadd.xlane.f32.xlu0 %v712
  %v714 = vpop.xlane.xlu0 %713
  %v715 = vmul.f32 %v711, %v201
  %v716 = vmul.f32 %v714, %v201
  %v717 = vadd.f32 %v715, 1e-12
  %v718 = vadd.f32 %v716, 1e-12
  %v719 = vrsqrt.pop %v717
  %v720 = vrsqrt.pop %v718
  %v721 = vmul.f32 %v705, %v719
  %v722 = vmul.f32 %v706, %v720
  %v723 = vmul.f32 %v721, %v695
  %v724 = vmul.f32 %v722, %v695
  %v725 = vadd.f32 %v723, %v696
  %v726 = vadd.f32 %v724, %v696
  %v727 = vpack.c.bf16 %v726, %v725
  %v728 = vld [vmem:[%s2 + $0x64] sm:$0xf]
  %v729 = vld [vmem:[%s2 + $0x68] sm:$0xf]
  %v730 = vld [vmem:[%s2 + $0x6c] sm:$0xf]
  %v731 = vld [vmem:[%s2 + $0x70] sm:$0xf]
  %v732 = vld [vmem:[%s4 + $0x10] ss:$0 sm:$0xff]
  %v737 = vunpack.c.l.b16 %v728
  %v738 = vunpack.c.l.b16 %v729
  %v739 = vunpack.c.l.b16 %v730
  %v740 = vunpack.c.l.b16 %v731
  %v741 = vpack.c.b16 %v738, %v737
  %v742 = vpack.c.b16 %v740, %v739
  %v746 = vsel %vm194, %v727, 0
  %748 = vmatprep.subr.bf16.mxu0 0
  %749 = vmatpush1.bf16.msra.mxu0 0
  %750 = vmatprep.subr.bf16.mxu0 0
  %751 = vmatpush1.bf16.msra.mxu0 0
  %752 = vmatprep.subr.bf16.mxu0 0
  %753 = vmatpush1.bf16.msra.mxu0 0
  %754 = vmatprep.subr.bf16.mxu0 0
  %755 = vmatpush1.bf16.msra.mxu0 0
  %756 = vmatprep.subr.bf16.mxu0 0
  %757 = vmatpush1.bf16.msra.mxu0 0
  %758 = vmatprep.subr.bf16.mxu0 0
  %759 = vmatpush1.bf16.msra.mxu0 0
  %760 = vmatprep.subr.bf16.mxu0 0
  %761 = vmatpush1.bf16.msra.mxu0 %v742
  %762 = vmatprep.subr.bf16.mxu0 0
  %763 = vmatpush1.bf16.msra.mxu0 %v741
  %764 = vmatprep.subr.bf16.mxu0 0
  %765 = vmatpush2.bf16.msra.mxu0 0
  %766 = vmatprep.subr.bf16.mxu0 0
  %767 = vmatpush2.bf16.msra.mxu0 0
  %768 = vmatprep.subr.bf16.mxu0 0
  %769 = vmatpush2.bf16.msra.mxu0 0
  %770 = vmatprep.subr.bf16.mxu0 0
  %771 = vmatpush2.bf16.msra.mxu0 0
  %772 = vmatprep.subr.bf16.mxu0 0
  %773 = vmatpush2.bf16.msra.mxu0 0
  %774 = vmatprep.subr.bf16.mxu0 0
  %775 = vmatpush2.bf16.msra.mxu0 0
  %776 = vmatprep.subr.bf16.mxu0 0
  %777 = vmatpush2.bf16.msra.mxu0 0
  %778 = vmatprep.subr.bf16.mxu0 0
  %779 = vmatpush2.bf16.msra.mxu0 0
  %780 = vmatprep.mubr.bf16.mxu0 0
  %781 = vmatmul.mubr.bf16.gmra.mxu0 %v746
  %v782 = vpop.f32.mrf.mxu0
  %v783 = vadd.f32 %v732, %v782
  %v784 = vpop.f32.mrf.mxu0
  %v785 = vpop.f32.mrf.mxu0
  %v786 = vadd.f32 %v732, %v785
  %v787 = vpop.f32.mrf.mxu0
  %788 = vdwg.mxu0
  %v789 = vmul.f32 %v783, %v783
  %v790 = vmul.f32 %v786, %v786
  %v791 = vmul.f32 %v783, %v789
  %v792 = vmul.f32 %v786, %v790
  %v793 = vmul.f32 %v791, 0.044715
  %v794 = vmul.f32 %v792, 0.044715
  %v795 = vadd.f32 %v783, %v793
  %v796 = vadd.f32 %v786, %v794
  %v797 = vmul.f32 %v795, 0.7978846
  %v798 = vmul.f32 %v796, 0.7978846
  %v799 = vtanh.pop %v797
  %v800 = vtanh.pop %v798
  %v801 = vadd.f32 %v799, 1.0
  %v802 = vadd.f32 %v800, 1.0
  %v803 = vmul.f32 %v801, 0.5
  %v804 = vmul.f32 %v802, 0.5
  %v805 = vmul.f32 %v783, %v803
  %v806 = vmul.f32 %v786, %v804
  %v807 = vpack.c.bf16 %v806, %v805
  %v808 = vld [vmem:[%s2 + $0x74] sm:$0xf]
  %v809 = vld [vmem:[%s2 + $0x78] sm:$0xf]
  %v810 = vld [vmem:[%s2 + $0x7c] sm:$0xf]
  %v811 = vld [vmem:[%s2 + $0x80] sm:$0xf]
  %v812 = vld [vmem:[%s2 + $0x84] sm:$0xf]
  %v813 = vld [vmem:[%s2 + $0x88] sm:$0xf]
  %v814 = vld [vmem:[%s2 + $0x8c] sm:$0xf]
  %v815 = vld [vmem:[%s2 + $0x90] sm:$0xf]
  %v816 = vld [vmem:[%s4 + $0x11] ss:$0 sm:$0xff]
  %v825 = vunpack.c.l.b16 %v808
  %v826 = vunpack.c.l.b16 %v809
  %v827 = vunpack.c.l.b16 %v810
  %v828 = vunpack.c.l.b16 %v811
  %v829 = vunpack.c.l.b16 %v812
  %v830 = vunpack.c.l.b16 %v813
  %v831 = vunpack.c.l.b16 %v814
  %v832 = vunpack.c.l.b16 %v815
  %v833 = vpack.c.b16 %v826, %v825
  %v834 = vpack.c.b16 %v828, %v827
  %v835 = vpack.c.b16 %v830, %v829
  %v836 = vpack.c.b16 %v832, %v831
  %vm841 = vcmask 523264
  %v843 = vsel %vm841, %v807, 0
  %845 = vmatprep.subr.bf16.mxu0 0
  %846 = vmatpush1.bf16.msra.mxu0 0
  %847 = vmatprep.subr.bf16.mxu0 0
  %848 = vmatpush1.bf16.msra.mxu0 0
  %849 = vmatprep.subr.bf16.mxu0 0
  %850 = vmatpush1.bf16.msra.mxu0 0
  %851 = vmatprep.subr.bf16.mxu0 0
  %852 = vmatpush1.bf16.msra.mxu0 0
  %853 = vmatprep.subr.bf16.mxu0 0
  %854 = vmatpush1.bf16.msra.mxu0 %v836
  %855 = vmatprep.subr.bf16.mxu0 0
  %856 = vmatpush1.bf16.msra.mxu0 %v835
  %857 = vmatprep.subr.bf16.mxu0 0
  %858 = vmatpush1.bf16.msra.mxu0 %v834
  %859 = vmatprep.subr.bf16.mxu0 0
  %860 = vmatpush1.bf16.msra.mxu0 %v833
  %861 = vmatprep.subr.bf16.mxu0 0
  %862 = vmatpush2.bf16.msra.mxu0 0
  %863 = vmatprep.subr.bf16.mxu0 0
  %864 = vmatpush2.bf16.msra.mxu0 0
  %865 = vmatprep.subr.bf16.mxu0 0
  %866 = vmatpush2.bf16.msra.mxu0 0
  %867 = vmatprep.subr.bf16.mxu0 0
  %868 = vmatpush2.bf16.msra.mxu0 0
  %869 = vmatprep.subr.bf16.mxu0 0
  %870 = vmatpush2.bf16.msra.mxu0 0
  %871 = vmatprep.subr.bf16.mxu0 0
  %872 = vmatpush2.bf16.msra.mxu0 0
  %873 = vmatprep.subr.bf16.mxu0 0
  %874 = vmatpush2.bf16.msra.mxu0 0
  %875 = vmatprep.subr.bf16.mxu0 0
  %876 = vmatpush2.bf16.msra.mxu0 0
  %877 = vmatprep.mubr.bf16.mxu0 0
  %878 = vmatmul.mubr.bf16.gmra.mxu0 %v843
  %v879 = vpop.f32.mrf.mxu0
  %v880 = vadd.f32 %v816, %v879
  %v881 = vpop.f32.mrf.mxu0
  %v882 = vpop.f32.mrf.mxu0
  %v883 = vadd.f32 %v816, %v882
  %v884 = vpop.f32.mrf.mxu0
  %885 = vdwg.mxu0
  %v886 = vadd.f32 %v725, %v880
  %v887 = vadd.f32 %v726, %v883
  %v888 = vld [vmem:[%s4 + $0x12] ss:$0 sm:$0xff]
  %v889 = vld [vmem:[%s4 + $0x13] ss:$0 sm:$0xff]
  %v890 = vsel %vm194, %v886, 0.0
  %891 = vadd.xlane.f32.xlu0 %v890
  %v892 = vpop.xlane.xlu0 %891
  %v893 = vsel %vm194, %v887, 0.0
  %894 = vadd.xlane.f32.xlu0 %v893
  %v895 = vpop.xlane.xlu0 %894
  %v896 = vmul.f32 %v892, %v201
  %v897 = vmul.f32 %v895, %v201
  %v898 = vsub.f32 %v886, %v896
  %v899 = vsub.f32 %v887, %v897
  %v900 = vmul.f32 %v898, %v898
  %v901 = vmul.f32 %v899, %v899
  %v902 = vsel %vm194, %v900, 0.0
  %903 = vadd.xlane.f32.xlu0 %v902
  %v904 = vpop.xlane.xlu0 %903
  %v905 = vsel %vm194, %v901, 0.0
  %906 = vadd.xlane.f32.xlu0 %v905
  %v907 = vpop.xlane.xlu0 %906
  %v908 = vmul.f32 %v904, %v201
  %v909 = vmul.f32 %v907, %v201
  %v910 = vadd.f32 %v908, 1e-12
  %v911 = vadd.f32 %v909, 1e-12
  %v912 = vrsqrt.pop %v910
  %v913 = vrsqrt.pop %v911
  %v914 = vmul.f32 %v898, %v912
  %v915 = vmul.f32 %v899, %v913
  %v916 = vmul.f32 %v914, %v888
  %v917 = vmul.f32 %v915, %v888
  %v918 = vadd.f32 %v916, %v889
  %v919 = vadd.f32 %v917, %v889
  %v920 = vpack.c.bf16 %v919, %v918
  %v921 = vld [vmem:[%s2 + $0x94] sm:$0xf]
  %v922 = vld [vmem:[%s2 + $0x98] sm:$0xf]
  %v923 = vld [vmem:[%s2 + $0x9c] sm:$0xf]
  %v924 = vld [vmem:[%s2 + $0xa0] sm:$0xf]
  %v925 = vld [vmem:[%s4 + $0x14] ss:$0 sm:$0xff]
  %v930 = vunpack.c.l.b16 %v921
  %v931 = vunpack.c.l.b16 %v922
  %v932 = vunpack.c.l.b16 %v923
  %v933 = vunpack.c.l.b16 %v924
  %v934 = vpack.c.b16 %v931, %v930
  %v935 = vpack.c.b16 %v933, %v932
  %v939 = vsel %vm194, %v920, 0
  %941 = vmatprep.subr.bf16.mxu0 0
  %942 = vmatpush1.bf16.msra.mxu0 0
  %943 = vmatprep.subr.bf16.mxu0 0
  %944 = vmatpush1.bf16.msra.mxu0 0
  %945 = vmatprep.subr.bf16.mxu0 0
  %946 = vmatpush1.bf16.msra.mxu0 0
  %947 = vmatprep.subr.bf16.mxu0 0
  %948 = vmatpush1.bf16.msra.mxu0 0
  %949 = vmatprep.subr.bf16.mxu0 0
  %950 = vmatpush1.bf16.msra.mxu0 0
  %951 = vmatprep.subr.bf16.mxu0 0
  %952 = vmatpush1.bf16.msra.mxu0 0
  %953 = vmatprep.subr.bf16.mxu0 0
  %954 = vmatpush1.bf16.msra.mxu0 %v935
  %955 = vmatprep.subr.bf16.mxu0 0
  %956 = vmatpush1.bf16.msra.mxu0 %v934
  %957 = vmatprep.subr.bf16.mxu0 0
  %958 = vmatpush2.bf16.msra.mxu0 0
  %959 = vmatprep.subr.bf16.mxu0 0
  %960 = vmatpush2.bf16.msra.mxu0 0
  %961 = vmatprep.subr.bf16.mxu0 0
  %962 = vmatpush2.bf16.msra.mxu0 0
  %963 = vmatprep.subr.bf16.mxu0 0
  %964 = vmatpush2.bf16.msra.mxu0 0
  %965 = vmatprep.subr.bf16.mxu0 0
  %966 = vmatpush2.bf16.msra.mxu0 0
  %967 = vmatprep.subr.bf16.mxu0 0
  %968 = vmatpush2.bf16.msra.mxu0 0
  %969 = vmatprep.subr.bf16.mxu0 0
  %970 = vmatpush2.bf16.msra.mxu0 0
  %971 = vmatprep.subr.bf16.mxu0 0
  %972 = vmatpush2.bf16.msra.mxu0 0
  %973 = vmatprep.mubr.bf16.mxu0 0
  %974 = vmatmul.mubr.bf16.gmra.mxu0 %v939
  %v975 = vpop.f32.mrf.mxu0
  %v976 = vadd.f32 %v925, %v975
  %v977 = vpop.f32.mrf.mxu0
  %v978 = vpop.f32.mrf.mxu0
  %v979 = vadd.f32 %v925, %v978
  %v980 = vpop.f32.mrf.mxu0
  %981 = vdwg.mxu0
  %984 = vrot.lane.b32.xlu0 %v976, 96
  %v985 = vpop.permute.xlu0 %984
  %986 = vrot.lane.b32.xlu0 %v979, 96
  %v987 = vpop.permute.xlu0 %986
  %v988 = vsel %vm296, %v976, 0
  %v990 = vsel %vm296, %v979, 0
  %v992 = vsel %vm296, %v985, 0
  %v994 = vsel %vm296, %v987, 0
  %996 = vmatprep.subr.mxu0 0.0
  %997 = vmatpush1.xpose.msra.mxu0 0.0
  %998 = vmatprep.subr.mxu0 0.0
  %999 = vmatpush1.xpose.msra.mxu0 0.0
  %1000 = vmatprep.subr.mxu0 0.0
  %1001 = vmatpush1.xpose.msra.mxu0 0.0
  %1002 = vmatprep.subr.mxu0 0.0
  %1003 = vmatpush1.xpose.msra.mxu0 0.0
  %1004 = vmatprep.subr.mxu0 0.0
  %1005 = vmatpush1.xpose.msra.mxu0 0.0
  %1006 = vmatprep.subr.mxu0 0.0
  %1007 = vmatpush1.xpose.msra.mxu0 0.0
  %1008 = vmatprep.subr.mxu0 0.0
  %1009 = vmatpush1.xpose.msra.mxu0 0.0
  %1010 = vmatprep.subr.mxu0 0.0
  %1011 = vmatpush1.xpose.msra.mxu0 0.0
  %1012 = vmatprep.subr.mxu0 0.0
  %1013 = vmatpush1.xpose.msra.mxu0 0.0
  %1014 = vmatprep.subr.mxu0 0.0
  %1015 = vmatpush1.xpose.msra.mxu0 0.0
  %1016 = vmatprep.subr.mxu0 0.0
  %1017 = vmatpush1.xpose.msra.mxu0 0.0
  %1018 = vmatprep.subr.mxu0 0.0
  %1019 = vmatpush1.xpose.msra.mxu0 0.0
  %1020 = vmatprep.subr.mxu0 0.0
  %1021 = vmatpush1.xpose.msra.mxu0 0.0
  %1022 = vmatprep.subr.mxu0 0.0
  %1023 = vmatpush1.xpose.msra.mxu0 0.0
  %1024 = vmatprep.subr.mxu0 0.0
  %1025 = vmatpush1.xpose.msra.mxu0 %v994
  %1026 = vmatprep.subr.mxu0 0.0
  %1027 = vmatpush1.xpose.msra.mxu0 %v992
  %1028 = vmatprep.subr.mxu0 0.0
  %1029 = vmatpush2.xpose.msra.mxu0 0.0
  %1030 = vmatprep.subr.mxu0 0.0
  %1031 = vmatpush2.xpose.msra.mxu0 0.0
  %1032 = vmatprep.subr.mxu0 0.0
  %1033 = vmatpush2.xpose.msra.mxu0 0.0
  %1034 = vmatprep.subr.mxu0 0.0
  %1035 = vmatpush2.xpose.msra.mxu0 0.0
  %1036 = vmatprep.subr.mxu0 0.0
  %1037 = vmatpush2.xpose.msra.mxu0 0.0
  %1038 = vmatprep.subr.mxu0 0.0
  %1039 = vmatpush2.xpose.msra.mxu0 0.0
  %1040 = vmatprep.subr.mxu0 0.0
  %1041 = vmatpush2.xpose.msra.mxu0 0.0
  %1042 = vmatprep.subr.mxu0 0.0
  %1043 = vmatpush2.xpose.msra.mxu0 0.0
  %1044 = vmatprep.subr.mxu0 0.0
  %1045 = vmatpush2.xpose.msra.mxu0 0.0
  %1046 = vmatprep.subr.mxu0 0.0
  %1047 = vmatpush2.xpose.msra.mxu0 0.0
  %1048 = vmatprep.subr.mxu0 0.0
  %1049 = vmatpush2.xpose.msra.mxu0 0.0
  %1050 = vmatprep.subr.mxu0 0.0
  %1051 = vmatpush2.xpose.msra.mxu0 0.0
  %1052 = vmatprep.subr.mxu0 0.0
  %1053 = vmatpush2.xpose.msra.mxu0 0.0
  %1054 = vmatprep.subr.mxu0 0.0
  %1055 = vmatpush2.xpose.msra.mxu0 0.0
  %1056 = vmatprep.subr.mxu0 0.0
  %1057 = vmatpush2.xpose.msra.mxu0 0.0
  %1058 = vmatprep.subr.mxu0 0.0
  %1059 = vmatpush2.xpose.msra.mxu0 0.0
  %1060 = vmatprep.mubr.f32.mxu0 0.0
  %1061 = vmatmul.mubr.f32.gmra.mxu0 %v988
  %v1062 = vpop.f32.mrf.mxu0
  %v1063 = vadd.f32 0.0, %v1062
  %v1064 = vpop.f32.mrf.mxu0
  %1065 = vmatprep.mubr.f32.mxu0 0.0
  %1066 = vmatmul.mubr.f32.gmra.mxu0 %v990
  %v1067 = vpop.f32.mrf.mxu0
  %v1068 = vadd.f32 0.0, %v1067
  %v1069 = vpop.f32.mrf.mxu0
  %1070 = vdwg.mxu0
  %v1071 = vmul.f32 %v1063, 0.25
  %v1072 = vmul.f32 %v1068, 0.25
  %v1073 = vadd.f32 %v1071, %v226
  %v1074 = vadd.f32 %v1072, %v227
  %1075 = vrot.lane.b32.xlu0 %v976, 112
  %v1076 = vpop.permute.xlu0 %1075
  %1077 = vrot.lane.b32.xlu0 %v979, 112
  %v1078 = vpop.permute.xlu0 %1077
  %1079 = vrot.lane.b32.xlu0 %v976, 80
  %v1080 = vpop.permute.xlu0 %1079
  %1081 = vrot.lane.b32.xlu0 %v979, 80
  %v1082 = vpop.permute.xlu0 %1081
  %v1083 = vsel %vm296, %v1076, 0
  %v1085 = vsel %vm296, %v1078, 0
  %v1087 = vsel %vm296, %v1080, 0
  %v1089 = vsel %vm296, %v1082, 0
  %1091 = vmatprep.subr.mxu0 0.0
  %1092 = vmatpush1.xpose.msra.mxu0 0.0
  %1093 = vmatprep.subr.mxu0 0.0
  %1094 = vmatpush1.xpose.msra.mxu0 0.0
  %1095 = vmatprep.subr.mxu0 0.0
  %1096 = vmatpush1.xpose.msra.mxu0 0.0
  %1097 = vmatprep.subr.mxu0 0.0
  %1098 = vmatpush1.xpose.msra.mxu0 0.0
  %1099 = vmatprep.subr.mxu0 0.0
  %1100 = vmatpush1.xpose.msra.mxu0 0.0
  %1101 = vmatprep.subr.mxu0 0.0
  %1102 = vmatpush1.xpose.msra.mxu0 0.0
  %1103 = vmatprep.subr.mxu0 0.0
  %1104 = vmatpush1.xpose.msra.mxu0 0.0
  %1105 = vmatprep.subr.mxu0 0.0
  %1106 = vmatpush1.xpose.msra.mxu0 0.0
  %1107 = vmatprep.subr.mxu0 0.0
  %1108 = vmatpush1.xpose.msra.mxu0 0.0
  %1109 = vmatprep.subr.mxu0 0.0
  %1110 = vmatpush1.xpose.msra.mxu0 0.0
  %1111 = vmatprep.subr.mxu0 0.0
  %1112 = vmatpush1.xpose.msra.mxu0 0.0
  %1113 = vmatprep.subr.mxu0 0.0
  %1114 = vmatpush1.xpose.msra.mxu0 0.0
  %1115 = vmatprep.subr.mxu0 0.0
  %1116 = vmatpush1.xpose.msra.mxu0 0.0
  %1117 = vmatprep.subr.mxu0 0.0
  %1118 = vmatpush1.xpose.msra.mxu0 0.0
  %1119 = vmatprep.subr.mxu0 0.0
  %1120 = vmatpush1.xpose.msra.mxu0 %v1089
  %1121 = vmatprep.subr.mxu0 0.0
  %1122 = vmatpush1.xpose.msra.mxu0 %v1087
  %1123 = vmatprep.subr.mxu0 0.0
  %1124 = vmatpush2.xpose.msra.mxu0 0.0
  %1125 = vmatprep.subr.mxu0 0.0
  %1126 = vmatpush2.xpose.msra.mxu0 0.0
  %1127 = vmatprep.subr.mxu0 0.0
  %1128 = vmatpush2.xpose.msra.mxu0 0.0
  %1129 = vmatprep.subr.mxu0 0.0
  %1130 = vmatpush2.xpose.msra.mxu0 0.0
  %1131 = vmatprep.subr.mxu0 0.0
  %1132 = vmatpush2.xpose.msra.mxu0 0.0
  %1133 = vmatprep.subr.mxu0 0.0
  %1134 = vmatpush2.xpose.msra.mxu0 0.0
  %1135 = vmatprep.subr.mxu0 0.0
  %1136 = vmatpush2.xpose.msra.mxu0 0.0
  %1137 = vmatprep.subr.mxu0 0.0
  %1138 = vmatpush2.xpose.msra.mxu0 0.0
  %1139 = vmatprep.subr.mxu0 0.0
  %1140 = vmatpush2.xpose.msra.mxu0 0.0
  %1141 = vmatprep.subr.mxu0 0.0
  %1142 = vmatpush2.xpose.msra.mxu0 0.0
  %1143 = vmatprep.subr.mxu0 0.0
  %1144 = vmatpush2.xpose.msra.mxu0 0.0
  %1145 = vmatprep.subr.mxu0 0.0
  %1146 = vmatpush2.xpose.msra.mxu0 0.0
  %1147 = vmatprep.subr.mxu0 0.0
  %1148 = vmatpush2.xpose.msra.mxu0 0.0
  %1149 = vmatprep.subr.mxu0 0.0
  %1150 = vmatpush2.xpose.msra.mxu0 0.0
  %1151 = vmatprep.subr.mxu0 0.0
  %1152 = vmatpush2.xpose.msra.mxu0 0.0
  %1153 = vmatprep.subr.mxu0 0.0
  %1154 = vmatpush2.xpose.msra.mxu0 0.0
  %1155 = vmatprep.mubr.f32.mxu0 0.0
  %1156 = vmatmul.mubr.f32.gmra.mxu0 %v1083
  %v1157 = vpop.f32.mrf.mxu0
  %v1158 = vadd.f32 0.0, %v1157
  %v1159 = vpop.f32.mrf.mxu0
  %1160 = vmatprep.mubr.f32.mxu0 0.0
  %1161 = vmatmul.mubr.f32.gmra.mxu0 %v1085
  %v1162 = vpop.f32.mrf.mxu0
  %v1163 = vadd.f32 0.0, %v1162
  %v1164 = vpop.f32.mrf.mxu0
  %1165 = vdwg.mxu0
  %v1166 = vmul.f32 %v1158, 0.25
  %v1167 = vmul.f32 %v1163, 0.25
  %v1168 = vadd.f32 %v1166, %v226
  %v1169 = vadd.f32 %v1167, %v227
  %v1170 = vsel %vm296, %v1073, -inf
  %1171 = vmax.xlane.f32.xlu0 %v1170
  %v1172 = vpop.xlane.xlu0 %1171
  %v1173 = vsel %vm296, %v1074, -inf
  %1174 = vmax.xlane.f32.xlu0 %v1173
  %v1175 = vpop.xlane.xlu0 %1174
  %v1176 = vsub.f32 %v1073, %v1172
  %v1177 = vsub.f32 %v1074, %v1175
  %v1178 = vmul.f32 %v1176, 1.442695
  %v1179 = vpow.pop %v1178
  %v1180 = vmul.f32 %v1177, 1.442695
  %v1181 = vpow.pop %v1180
  %v1182 = vsel %vm296, %v1179, 0.0
  %1183 = vadd.xlane.f32.xlu0 %v1182
  %v1184 = vpop.xlane.xlu0 %1183
  %v1185 = vsel %vm296, %v1181, 0.0
  %1186 = vadd.xlane.f32.xlu0 %v1185
  %v1187 = vpop.xlane.xlu0 %1186
  %v1188 = vrcp.pop %v1184
  %v1189 = vrcp.pop %v1187
  %v1190 = vmul.f32 %v1179, %v1188
  %v1191 = vmul.f32 %v1181, %v1189
  %v1192 = vpack.c.bf16 %v979, %v976
  %v1193 = vpack.c.bf16 %v1191, %v1190
  %1195 = vrot.lane.b32.xlu0 %v1192, 64
  %v1196 = vpop.permute.xlu0 %1195
  %v1199 = vsel %vm296, %v1193, 0
  %1201 = vmatprep.subr.bf16.mxu0 0
  %1202 = vmatpush1.bf16.msra.mxu0 0
  %1203 = vmatprep.subr.bf16.mxu0 0
  %1204 = vmatpush1.bf16.msra.mxu0 0
  %1205 = vmatprep.subr.bf16.mxu0 0
  %1206 = vmatpush1.bf16.msra.mxu0 0
  %1207 = vmatprep.subr.bf16.mxu0 0
  %1208 = vmatpush1.bf16.msra.mxu0 0
  %1209 = vmatprep.subr.bf16.mxu0 0
  %1210 = vmatpush1.bf16.msra.mxu0 0
  %1211 = vmatprep.subr.bf16.mxu0 0
  %1212 = vmatpush1.bf16.msra.mxu0 0
  %1213 = vmatprep.subr.bf16.mxu0 0
  %1214 = vmatpush1.bf16.msra.mxu0 0
  %1215 = vmatprep.subr.bf16.mxu0 0
  %1216 = vmatpush1.bf16.msra.mxu0 %v1196
  %1217 = vmatprep.subr.bf16.mxu0 0
  %1218 = vmatpush2.bf16.msra.mxu0 0
  %1219 = vmatprep.subr.bf16.mxu0 0
  %1220 = vmatpush2.bf16.msra.mxu0 0
  %1221 = vmatprep.subr.bf16.mxu0 0
  %1222 = vmatpush2.bf16.msra.mxu0 0
  %1223 = vmatprep.subr.bf16.mxu0 0
  %1224 = vmatpush2.bf16.msra.mxu0 0
  %1225 = vmatprep.subr.bf16.mxu0 0
  %1226 = vmatpush2.bf16.msra.mxu0 0
  %1227 = vmatprep.subr.bf16.mxu0 0
  %1228 = vmatpush2.bf16.msra.mxu0 0
  %1229 = vmatprep.subr.bf16.mxu0 0
  %1230 = vmatpush2.bf16.msra.mxu0 0
  %1231 = vmatprep.subr.bf16.mxu0 0
  %1232 = vmatpush2.bf16.msra.mxu0 0
  %1233 = vmatprep.mubr.bf16.mxu0 0
  %1234 = vmatmul.mubr.bf16.gmra.mxu0 %v1199
  %v1235 = vpop.f32.mrf.mxu0
  %v1236 = vadd.f32 0.0, %v1235
  %v1237 = vpop.f32.mrf.mxu0
  %v1238 = vpop.f32.mrf.mxu0
  %v1239 = vadd.f32 0.0, %v1238
  %v1240 = vpop.f32.mrf.mxu0
  %1241 = vdwg.mxu0
  %v1242 = vsel %vm296, %v1168, -inf
  %1243 = vmax.xlane.f32.xlu0 %v1242
  %v1244 = vpop.xlane.xlu0 %1243
  %v1245 = vsel %vm296, %v1169, -inf
  %1246 = vmax.xlane.f32.xlu0 %v1245
  %v1247 = vpop.xlane.xlu0 %1246
  %v1248 = vsub.f32 %v1168, %v1244
  %v1249 = vsub.f32 %v1169, %v1247
  %v1250 = vmul.f32 %v1248, 1.442695
  %v1251 = vpow.pop %v1250
  %v1252 = vmul.f32 %v1249, 1.442695
  %v1253 = vpow.pop %v1252
  %v1254 = vsel %vm296, %v1251, 0.0
  %1255 = vadd.xlane.f32.xlu0 %v1254
  %v1256 = vpop.xlane.xlu0 %1255
  %v1257 = vsel %vm296, %v1253, 0.0
  %1258 = vadd.xlane.f32.xlu0 %v1257
  %v1259 = vpop.xlane.xlu0 %1258
  %v1260 = vrcp.pop %v1256
  %v1261 = vrcp.pop %v1259
  %v1262 = vmul.f32 %v1251, %v1260
  %v1263 = vmul.f32 %v1253, %v1261
  %v1264 = vpack.c.bf16 %v1263, %v1262
  %1265 = vrot.lane.b32.xlu0 %v1192, 48
  %v1266 = vpop.permute.xlu0 %1265
  %v1269 = vsel %vm296, %v1264, 0
  %1271 = vmatprep.subr.bf16.mxu0 0
  %1272 = vmatpush1.bf16.msra.mxu0 0
  %1273 = vmatprep.subr.bf16.mxu0 0
  %1274 = vmatpush1.bf16.msra.mxu0 0
  %1275 = vmatprep.subr.bf16.mxu0 0
  %1276 = vmatpush1.bf16.msra.mxu0 0
  %1277 = vmatprep.subr.bf16.mxu0 0
  %1278 = vmatpush1.bf16.msra.mxu0 0
  %1279 = vmatprep.subr.bf16.mxu0 0
  %1280 = vmatpush1.bf16.msra.mxu0 0
  %1281 = vmatprep.subr.bf16.mxu0 0
  %1282 = vmatpush1.bf16.msra.mxu0 0
  %1283 = vmatprep.subr.bf16.mxu0 0
  %1284 = vmatpush1.bf16.msra.mxu0 0
  %1285 = vmatprep.subr.bf16.mxu0 0
  %1286 = vmatpush1.bf16.msra.mxu0 %v1266
  %1287 = vmatprep.subr.bf16.mxu0 0
  %1288 = vmatpush2.bf16.msra.mxu0 0
  %1289 = vmatprep.subr.bf16.mxu0 0
  %1290 = vmatpush2.bf16.msra.mxu0 0
  %1291 = vmatprep.subr.bf16.mxu0 0
  %1292 = vmatpush2.bf16.msra.mxu0 0
  %1293 = vmatprep.subr.bf16.mxu0 0
  %1294 = vmatpush2.bf16.msra.mxu0 0
  %1295 = vmatprep.subr.bf16.mxu0 0
  %1296 = vmatpush2.bf16.msra.mxu0 0
  %1297 = vmatprep.subr.bf16.mxu0 0
  %1298 = vmatpush2.bf16.msra.mxu0 0
  %1299 = vmatprep.subr.bf16.mxu0 0
  %1300 = vmatpush2.bf16.msra.mxu0 0
  %1301 = vmatprep.subr.bf16.mxu0 0
  %1302 = vmatpush2.bf16.msra.mxu0 0
  %1303 = vmatprep.mubr.bf16.mxu0 0
  %1304 = vmatmul.mubr.bf16.gmra.mxu0 %v1269
  %v1305 = vpop.f32.mrf.mxu0
  %v1306 = vadd.f32 0.0, %v1305
  %v1307 = vpop.f32.mrf.mxu0
  %v1308 = vpop.f32.mrf.mxu0
  %v1309 = vadd.f32 0.0, %v1308
  %v1310 = vpop.f32.mrf.mxu0
  %1311 = vdwg.mxu0
  %1314 = vrot.lane.b32.xlu0 %v1306, 16
  %v1315 = vpop.permute.xlu0 %1314
  %1316 = vrot.lane.b32.xlu0 %v1309, 16
  %v1317 = vpop.permute.xlu0 %1316
  %v1320 = vsel %vm296, %v1236, %v1315
  %v1321 = vsel %vm296, %v1239, %v1317
  %v1322 = vpack.c.bf16 %v1321, %v1320
  %v1323 = vld [vmem:[%s2 + $0xa4] sm:$0xf]
  %v1324 = vld [vmem:[%s2 + $0xa8] sm:$0xf]
  %v1325 = vld [vmem:[%s2 + $0xac] sm:$0xf]
  %v1326 = vld [vmem:[%s2 + $0xb0] sm:$0xf]
  %v1327 = vld [vmem:[%s4 + $0x15] ss:$0 sm:$0xff]
  %v1332 = vunpack.c.l.b16 %v1323
  %v1333 = vunpack.c.l.b16 %v1324
  %v1334 = vunpack.c.l.b16 %v1325
  %v1335 = vunpack.c.l.b16 %v1326
  %v1336 = vpack.c.b16 %v1333, %v1332
  %v1337 = vpack.c.b16 %v1335, %v1334
  %v1341 = vsel %vm194, %v1322, 0
  %1343 = vmatprep.subr.bf16.mxu0 0
  %1344 = vmatpush1.bf16.msra.mxu0 0
  %1345 = vmatprep.subr.bf16.mxu0 0
  %1346 = vmatpush1.bf16.msra.mxu0 0
  %1347 = vmatprep.subr.bf16.mxu0 0
  %1348 = vmatpush1.bf16.msra.mxu0 0
  %1349 = vmatprep.subr.bf16.mxu0 0
  %1350 = vmatpush1.bf16.msra.mxu0 0
  %1351 = vmatprep.subr.bf16.mxu0 0
  %1352 = vmatpush1.bf16.msra.mxu0 0
  %1353 = vmatprep.subr.bf16.mxu0 0
  %1354 = vmatpush1.bf16.msra.mxu0 0
  %1355 = vmatprep.subr.bf16.mxu0 0
  %1356 = vmatpush1.bf16.msra.mxu0 %v1337
  %1357 = vmatprep.subr.bf16.mxu0 0
  %1358 = vmatpush1.bf16.msra.mxu0 %v1336
  %1359 = vmatprep.subr.bf16.mxu0 0
  %1360 = vmatpush2.bf16.msra.mxu0 0
  %1361 = vmatprep.subr.bf16.mxu0 0
  %1362 = vmatpush2.bf16.msra.mxu0 0
  %1363 = vmatprep.subr.bf16.mxu0 0
  %1364 = vmatpush2.bf16.msra.mxu0 0
  %1365 = vmatprep.subr.bf16.mxu0 0
  %1366 = vmatpush2.bf16.msra.mxu0 0
  %1367 = vmatprep.subr.bf16.mxu0 0
  %1368 = vmatpush2.bf16.msra.mxu0 0
  %1369 = vmatprep.subr.bf16.mxu0 0
  %1370 = vmatpush2.bf16.msra.mxu0 0
  %1371 = vmatprep.subr.bf16.mxu0 0
  %1372 = vmatpush2.bf16.msra.mxu0 0
  %1373 = vmatprep.subr.bf16.mxu0 0
  %1374 = vmatpush2.bf16.msra.mxu0 0
  %1375 = vmatprep.mubr.bf16.mxu0 0
  %1376 = vmatmul.mubr.bf16.gmra.mxu0 %v1341
  %v1377 = vpop.f32.mrf.mxu0
  %v1378 = vadd.f32 %v1327, %v1377
  %v1379 = vpop.f32.mrf.mxu0
  %v1380 = vpop.f32.mrf.mxu0
  %v1381 = vadd.f32 %v1327, %v1380
  %v1382 = vpop.f32.mrf.mxu0
  %1383 = vdwg.mxu0
  %v1384 = vadd.f32 %v918, %v1378
  %v1385 = vadd.f32 %v919, %v1381
  %v1386 = vld [vmem:[%s4 + $0x16] ss:$0 sm:$0xff]
  %v1387 = vld [vmem:[%s4 + $0x17] ss:$0 sm:$0xff]
  %v1388 = vsel %vm194, %v1384, 0.0
  %1389 = vadd.xlane.f32.xlu0 %v1388
  %v1390 = vpop.xlane.xlu0 %1389
  %v1391 = vsel %vm194, %v1385, 0.0
  %1392 = vadd.xlane.f32.xlu0 %v1391
  %v1393 = vpop.xlane.xlu0 %1392
  %v1394 = vmul.f32 %v1390, %v201
  %v1395 = vmul.f32 %v1393, %v201
  %v1396 = vsub.f32 %v1384, %v1394
  %v1397 = vsub.f32 %v1385, %v1395
  %v1398 = vmul.f32 %v1396, %v1396
  %v1399 = vmul.f32 %v1397, %v1397
  %v1400 = vsel %vm194, %v1398, 0.0
  %1401 = vadd.xlane.f32.xlu0 %v1400
  %v1402 = vpop.xlane.xlu0 %1401
  %v1403 = vsel %vm194, %v1399, 0.0
  %1404 = vadd.xlane.f32.xlu0 %v1403
  %v1405 = vpop.xlane.xlu0 %1404
  %v1406 = vmul.f32 %v1402, %v201
  %v1407 = vmul.f32 %v1405, %v201
  %v1408 = vadd.f32 %v1406, 1e-12
  %v1409 = vadd.f32 %v1407, 1e-12
  %v1410 = vrsqrt.pop %v1408
  %v1411 = vrsqrt.pop %v1409
  %v1412 = vmul.f32 %v1396, %v1410
  %v1413 = vmul.f32 %v1397, %v1411
  %v1414 = vmul.f32 %v1412, %v1386
  %v1415 = vmul.f32 %v1413, %v1386
  %v1416 = vadd.f32 %v1414, %v1387
  %v1417 = vadd.f32 %v1415, %v1387
  %v1418 = vpack.c.bf16 %v1417, %v1416
  %v1419 = vld [vmem:[%s2 + $0xb4] sm:$0xf]
  %v1420 = vld [vmem:[%s2 + $0xb8] sm:$0xf]
  %v1421 = vld [vmem:[%s2 + $0xbc] sm:$0xf]
  %v1422 = vld [vmem:[%s2 + $0xc0] sm:$0xf]
  %v1423 = vld [vmem:[%s4 + $0x20] ss:$0 sm:$0xff]
  %v1428 = vunpack.c.l.b16 %v1419
  %v1429 = vunpack.c.l.b16 %v1420
  %v1430 = vunpack.c.l.b16 %v1421
  %v1431 = vunpack.c.l.b16 %v1422
  %v1432 = vpack.c.b16 %v1429, %v1428
  %v1433 = vpack.c.b16 %v1431, %v1430
  %v1437 = vsel %vm194, %v1418, 0
  %1439 = vmatprep.subr.bf16.mxu0 0
  %1440 = vmatpush1.bf16.msra.mxu0 0
  %1441 = vmatprep.subr.bf16.mxu0 0
  %1442 = vmatpush1.bf16.msra.mxu0 0
  %1443 = vmatprep.subr.bf16.mxu0 0
  %1444 = vmatpush1.bf16.msra.mxu0 0
  %1445 = vmatprep.subr.bf16.mxu0 0
  %1446 = vmatpush1.bf16.msra.mxu0 0
  %1447 = vmatprep.subr.bf16.mxu0 0
  %1448 = vmatpush1.bf16.msra.mxu0 0
  %1449 = vmatprep.subr.bf16.mxu0 0
  %1450 = vmatpush1.bf16.msra.mxu0 0
  %1451 = vmatprep.subr.bf16.mxu0 0
  %1452 = vmatpush1.bf16.msra.mxu0 %v1433
  %1453 = vmatprep.subr.bf16.mxu0 0
  %1454 = vmatpush1.bf16.msra.mxu0 %v1432
  %1455 = vmatprep.subr.bf16.mxu0 0
  %1456 = vmatpush2.bf16.msra.mxu0 0
  %1457 = vmatprep.subr.bf16.mxu0 0
  %1458 = vmatpush2.bf16.msra.mxu0 0
  %1459 = vmatprep.subr.bf16.mxu0 0
  %1460 = vmatpush2.bf16.msra.mxu0 0
  %1461 = vmatprep.subr.bf16.mxu0 0
  %1462 = vmatpush2.bf16.msra.mxu0 0
  %1463 = vmatprep.subr.bf16.mxu0 0
  %1464 = vmatpush2.bf16.msra.mxu0 0
  %1465 = vmatprep.subr.bf16.mxu0 0
  %1466 = vmatpush2.bf16.msra.mxu0 0
  %1467 = vmatprep.subr.bf16.mxu0 0
  %1468 = vmatpush2.bf16.msra.mxu0 0
  %1469 = vmatprep.subr.bf16.mxu0 0
  %1470 = vmatpush2.bf16.msra.mxu0 0
  %1471 = vmatprep.mubr.bf16.mxu0 0
  %1472 = vmatmul.mubr.bf16.gmra.mxu0 %v1437
  %v1473 = vpop.f32.mrf.mxu0
  %v1474 = vadd.f32 %v1423, %v1473
  %v1475 = vpop.f32.mrf.mxu0
  %v1476 = vpop.f32.mrf.mxu0
  %v1477 = vadd.f32 %v1423, %v1476
  %v1478 = vpop.f32.mrf.mxu0
  %1479 = vdwg.mxu0
  %v1480 = vmul.f32 %v1474, %v1474
  %v1481 = vmul.f32 %v1477, %v1477
  %v1482 = vmul.f32 %v1474, %v1480
  %v1483 = vmul.f32 %v1477, %v1481
  %v1484 = vmul.f32 %v1482, 0.044715
  %v1485 = vmul.f32 %v1483, 0.044715
  %v1486 = vadd.f32 %v1474, %v1484
  %v1487 = vadd.f32 %v1477, %v1485
  %v1488 = vmul.f32 %v1486, 0.7978846
  %v1489 = vmul.f32 %v1487, 0.7978846
  %v1490 = vtanh.pop %v1488
  %v1491 = vtanh.pop %v1489
  %v1492 = vadd.f32 %v1490, 1.0
  %v1493 = vadd.f32 %v1491, 1.0
  %v1494 = vmul.f32 %v1492, 0.5
  %v1495 = vmul.f32 %v1493, 0.5
  %v1496 = vmul.f32 %v1474, %v1494
  %v1497 = vmul.f32 %v1477, %v1495
  %v1498 = vpack.c.bf16 %v1497, %v1496
  %v1499 = vld [vmem:[%s2 + $0xc4] sm:$0xf]
  %v1500 = vld [vmem:[%s2 + $0xc8] sm:$0xf]
  %v1501 = vld [vmem:[%s2 + $0xcc] sm:$0xf]
  %v1502 = vld [vmem:[%s2 + $0xd0] sm:$0xf]
  %v1503 = vld [vmem:[%s2 + $0xd4] sm:$0xf]
  %v1504 = vld [vmem:[%s2 + $0xd8] sm:$0xf]
  %v1505 = vld [vmem:[%s2 + $0xdc] sm:$0xf]
  %v1506 = vld [vmem:[%s2 + $0xe0] sm:$0xf]
  %v1507 = vld [vmem:[%s4 + $0x21] ss:$0 sm:$0xff]
  %v1516 = vunpack.c.l.b16 %v1499
  %v1517 = vunpack.c.l.b16 %v1500
  %v1518 = vunpack.c.l.b16 %v1501
  %v1519 = vunpack.c.l.b16 %v1502
  %v1520 = vunpack.c.l.b16 %v1503
  %v1521 = vunpack.c.l.b16 %v1504
  %v1522 = vunpack.c.l.b16 %v1505
  %v1523 = vunpack.c.l.b16 %v1506
  %v1524 = vpack.c.b16 %v1517, %v1516
  %v1525 = vpack.c.b16 %v1519, %v1518
  %v1526 = vpack.c.b16 %v1521, %v1520
  %v1527 = vpack.c.b16 %v1523, %v1522
  %v1533 = vsel %vm841, %v1498, 0
  %1535 = vmatprep.subr.bf16.mxu0 0
  %1536 = vmatpush1.bf16.msra.mxu0 0
  %1537 = vmatprep.subr.bf16.mxu0 0
  %1538 = vmatpush1.bf16.msra.mxu0 0
  %1539 = vmatprep.subr.bf16.mxu0 0
  %1540 = vmatpush1.bf16.msra.mxu0 0
  %1541 = vmatprep.subr.bf16.mxu0 0
  %1542 = vmatpush1.bf16.msra.mxu0 0
  %1543 = vmatprep.subr.bf16.mxu0 0
  %1544 = vmatpush1.bf16.msra.mxu0 %v1527
  %1545 = vmatprep.subr.bf16.mxu0 0
  %1546 = vmatpush1.bf16.msra.mxu0 %v1526
  %1547 = vmatprep.subr.bf16.mxu0 0
  %1548 = vmatpush1.bf16.msra.mxu0 %v1525
  %1549 = vmatprep.subr.bf16.mxu0 0
  %1550 = vmatpush1.bf16.msra.mxu0 %v1524
  %1551 = vmatprep.subr.bf16.mxu0 0
  %1552 = vmatpush2.bf16.msra.mxu0 0
  %1553 = vmatprep.subr.bf16.mxu0 0
  %1554 = vmatpush2.bf16.msra.mxu0 0
  %1555 = vmatprep.subr.bf16.mxu0 0
  %1556 = vmatpush2.bf16.msra.mxu0 0
  %1557 = vmatprep.subr.bf16.mxu0 0
  %1558 = vmatpush2.bf16.msra.mxu0 0
  %1559 = vmatprep.subr.bf16.mxu0 0
  %1560 = vmatpush2.bf16.msra.mxu0 0
  %1561 = vmatprep.subr.bf16.mxu0 0
  %1562 = vmatpush2.bf16.msra.mxu0 0
  %1563 = vmatprep.subr.bf16.mxu0 0
  %1564 = vmatpush2.bf16.msra.mxu0 0
  %1565 = vmatprep.subr.bf16.mxu0 0
  %1566 = vmatpush2.bf16.msra.mxu0 0
  %1567 = vmatprep.mubr.bf16.mxu0 0
  %1568 = vmatmul.mubr.bf16.gmra.mxu0 %v1533
  %v1569 = vpop.f32.mrf.mxu0
  %v1570 = vadd.f32 %v1507, %v1569
  %v1571 = vpop.f32.mrf.mxu0
  %v1572 = vpop.f32.mrf.mxu0
  %v1573 = vadd.f32 %v1507, %v1572
  %v1574 = vpop.f32.mrf.mxu0
  %1575 = vdwg.mxu0
  %v1576 = vadd.f32 %v1416, %v1570
  %v1577 = vadd.f32 %v1417, %v1573
  %v1578 = vld [vmem:[%s4 + $0x22] ss:$0 sm:$0xff]
  %v1579 = vld [vmem:[%s4 + $0x23] ss:$0 sm:$0xff]
  %v1580 = vsel %vm194, %v1576, 0.0
  %1581 = vadd.xlane.f32.xlu0 %v1580
  %v1582 = vpop.xlane.xlu0 %1581
  %v1583 = vsel %vm194, %v1577, 0.0
  %1584 = vadd.xlane.f32.xlu0 %v1583
  %v1585 = vpop.xlane.xlu0 %1584
  %v1586 = vmul.f32 %v1582, %v201
  %v1587 = vmul.f32 %v1585, %v201
  %v1588 = vsub.f32 %v1576, %v1586
  %v1589 = vsub.f32 %v1577, %v1587
  %v1590 = vmul.f32 %v1588, %v1588
  %v1591 = vmul.f32 %v1589, %v1589
  %v1592 = vsel %vm194, %v1590, 0.0
  %1593 = vadd.xlane.f32.xlu0 %v1592
  %v1594 = vpop.xlane.xlu0 %1593
  %v1595 = vsel %vm194, %v1591, 0.0
  %1596 = vadd.xlane.f32.xlu0 %v1595
  %v1597 = vpop.xlane.xlu0 %1596
  %v1598 = vmul.f32 %v1594, %v201
  %v1599 = vmul.f32 %v1597, %v201
  %v1600 = vadd.f32 %v1598, 1e-12
  %v1601 = vadd.f32 %v1599, 1e-12
  %v1602 = vrsqrt.pop %v1600
  %v1603 = vrsqrt.pop %v1601
  %v1604 = vmul.f32 %v1588, %v1602
  %v1605 = vmul.f32 %v1589, %v1603
  %v1606 = vmul.f32 %v1604, %v1578
  %v1607 = vmul.f32 %v1605, %v1578
  %v1608 = vadd.f32 %v1606, %v1579
  %v1609 = vadd.f32 %v1607, %v1579
  %v1610 = vrot.slane %v1608, 1
  %v1611 = vrot.slane %v1609, 1
  %v1612 = vlaneseq
  %v1613 = vshrl.u32 %v1612, 7
  %vm1614 = vcmp.lt.s32.totalorder %v1613, 7
  %v1615 = vsel %vm1614, %v1610, %v1611
  %v1616 = vsel %vm1614, %v1611, %v1610
  %1619 = vrot.lane.b32.xlu0 %v1615, 32
  %v1620 = vpop.permute.xlu0 %1619
  %1621 = vrot.lane.b32.xlu0 %v1616, 32
  %v1622 = vpop.permute.xlu0 %1621
  %v1625 = vsel %vm194, %v1608, %v1620
  %v1626 = vsel %vm194, %v1609, %v1622
  %v1627 = vpack.c.bf16 %v1626, %v1625
  %v1628 = vld [vmem:[%s3] sm:$0xff]
  %v1629 = vld [vmem:[%s3 + $0x8] sm:$0xff]
  %v1630 = vld [vmem:[%s3 + $0x10] sm:$0xff]
  %v1631 = vld [vmem:[%s3 + $0x18] sm:$0xff]
  %v1632 = vld [vmem:[%s3 + $0x20] sm:$0xff]
  %v1633 = vld [vmem:[%s3 + $0x28] sm:$0xff]
  %v1634 = vld [vmem:[%s3 + $0x30] sm:$0xff]
  %v1635 = vld [vmem:[%s3 + $0x38] sm:$0xff]
  %s1636 = scalar_lea.vmem %s4, 2
  %v1637 = vld [vmem:[%s1636] ss:$8 sm:$0x3]
  %v1639 = vlaneseq
  %v1640 = vshrl.u32 %v1639, 7
  %v1641 = vsub.s32 0, %v1640
  %v1642 = vrot.slane %v1637, %v1641
  %v1643 = vlaneseq
  %v1644 = vshrl.u32 %v1643, 7
  %v1645 = vsub.s32 1, %v1644
  %v1646 = vrot.slane %v1637, %v1645
  %v1657 = vunpack.c.l.b16 %v1628
  %v1658 = vunpack.c.h.b16 %v1628
  %v1659 = vunpack.c.l.b16 %v1629
  %v1660 = vunpack.c.h.b16 %v1629
  %v1661 = vunpack.c.l.b16 %v1630
  %v1662 = vunpack.c.h.b16 %v1630
  %v1663 = vunpack.c.l.b16 %v1631
  %v1664 = vunpack.c.h.b16 %v1631
  %v1665 = vunpack.c.l.b16 %v1632
  %v1666 = vunpack.c.h.b16 %v1632
  %v1667 = vunpack.c.l.b16 %v1633
  %v1668 = vunpack.c.h.b16 %v1633
  %v1669 = vunpack.c.l.b16 %v1634
  %v1670 = vunpack.c.h.b16 %v1634
  %v1671 = vunpack.c.l.b16 %v1635
  %v1672 = vunpack.c.h.b16 %v1635
  %v1673 = vpack.c.b16 %v1659, %v1657
  %v1674 = vpack.c.b16 %v1660, %v1658
  %v1675 = vpack.c.b16 %v1663, %v1661
  %v1676 = vpack.c.b16 %v1664, %v1662
  %v1677 = vpack.c.b16 %v1667, %v1665
  %v1678 = vpack.c.b16 %v1668, %v1666
  %v1679 = vpack.c.b16 %v1671, %v1669
  %v1680 = vpack.c.b16 %v1672, %v1670
  %v1690 = vsel %vm841, %v1627, 0
  %1692 = vmatprep.subr.bf16.mxu0 0
  %1693 = vmatpush1.bf16.msra.mxu0 0
  %1694 = vmatprep.subr.bf16.mxu0 0
  %1695 = vmatpush1.bf16.msra.mxu0 0
  %1696 = vmatprep.subr.bf16.mxu0 0
  %1697 = vmatpush1.bf16.msra.mxu0 0
  %1698 = vmatprep.subr.bf16.mxu0 0
  %1699 = vmatpush1.bf16.msra.mxu0 0
  %1700 = vmatprep.subr.bf16.mxu0 %v1680
  %1701 = vmatpush1.bf16.msra.mxu0 %v1679
  %1702 = vmatprep.subr.bf16.mxu0 %v1678
  %1703 = vmatpush1.bf16.msra.mxu0 %v1677
  %1704 = vmatprep.subr.bf16.mxu0 %v1676
  %1705 = vmatpush1.bf16.msra.mxu0 %v1675
  %1706 = vmatprep.subr.bf16.mxu0 %v1674
  %1707 = vmatpush1.bf16.msra.mxu0 %v1673
  %1708 = vmatprep.subr.bf16.mxu0 0
  %1709 = vmatpush2.bf16.msra.mxu0 0
  %1710 = vmatprep.subr.bf16.mxu0 0
  %1711 = vmatpush2.bf16.msra.mxu0 0
  %1712 = vmatprep.subr.bf16.mxu0 0
  %1713 = vmatpush2.bf16.msra.mxu0 0
  %1714 = vmatprep.subr.bf16.mxu0 0
  %1715 = vmatpush2.bf16.msra.mxu0 0
  %1716 = vmatprep.subr.bf16.mxu0 0
  %1717 = vmatpush2.bf16.msra.mxu0 0
  %1718 = vmatprep.subr.bf16.mxu0 0
  %1719 = vmatpush2.bf16.msra.mxu0 0
  %1720 = vmatprep.subr.bf16.mxu0 0
  %1721 = vmatpush2.bf16.msra.mxu0 0
  %1722 = vmatprep.subr.bf16.mxu0 0
  %1723 = vmatpush2.bf16.msra.mxu0 0
  %1724 = vmatprep.mubr.bf16.mxu0 0
  %1725 = vmatmul.mubr.bf16.gmra.mxu0 %v1690
  %v1726 = vpop.f32.mrf.mxu0
  %v1727 = vadd.f32 %v1642, %v1726
  %v1728 = vpop.f32.mrf.mxu0
  %v1729 = vadd.f32 %v1646, %v1728
  %v1730 = vpop.f32.mrf.mxu0
  %v1731 = vadd.f32 %v1642, %v1730
  %v1732 = vpop.f32.mrf.mxu0
  %v1733 = vadd.f32 %v1646, %v1732
  %1734 = vdwg.mxu0
  %v1735 = vmax.f32 %v1727, 0.0
  %v1736 = vmax.f32 %v1729, 0.0
  %v1737 = vmax.f32 %v1731, 0.0
  %v1738 = vmax.f32 %v1733, 0.0
  %v1739 = vpack.c.bf16 %v1737, %v1735
  %v1740 = vpack.c.bf16 %v1738, %v1736
  %v1741 = vld [vmem:[%s1 + $0x20] sm:$0xf]
  %v1742 = vpack.c.bf16 %v1741, %v1741
  %v1744 = vsel %vm296, %v1742, 0
  %1746 = vmatprep.subr.bf16.mxu0 0
  %1747 = vmatpush1.bf16.msra.mxu0 0
  %1748 = vmatprep.subr.bf16.mxu0 0
  %1749 = vmatpush1.bf16.msra.mxu0 0
  %1750 = vmatprep.subr.bf16.mxu0 0
  %1751 = vmatpush1.bf16.msra.mxu0 0
  %1752 = vmatprep.subr.bf16.mxu0 0
  %1753 = vmatpush1.bf16.msra.mxu0 0
  %1754 = vmatprep.subr.bf16.mxu0 0
  %1755 = vmatpush1.bf16.msra.mxu0 0
  %1756 = vmatprep.subr.bf16.mxu0 0
  %1757 = vmatpush1.bf16.msra.mxu0 0
  %1758 = vmatprep.subr.bf16.mxu0 0
  %1759 = vmatpush1.bf16.msra.mxu0 0
  %1760 = vmatprep.subr.bf16.mxu0 %v1740
  %1761 = vmatpush1.bf16.msra.mxu0 %v1739
  %1762 = vmatprep.subr.bf16.mxu0 0
  %1763 = vmatpush2.bf16.msra.mxu0 0
  %1764 = vmatprep.subr.bf16.mxu0 0
  %1765 = vmatpush2.bf16.msra.mxu0 0
  %1766 = vmatprep.subr.bf16.mxu0 0
  %1767 = vmatpush2.bf16.msra.mxu0 0
  %1768 = vmatprep.subr.bf16.mxu0 0
  %1769 = vmatpush2.bf16.msra.mxu0 0
  %1770 = vmatprep.subr.bf16.mxu0 0
  %1771 = vmatpush2.bf16.msra.mxu0 0
  %1772 = vmatprep.subr.bf16.mxu0 0
  %1773 = vmatpush2.bf16.msra.mxu0 0
  %1774 = vmatprep.subr.bf16.mxu0 0
  %1775 = vmatpush2.bf16.msra.mxu0 0
  %1776 = vmatprep.subr.bf16.mxu0 0
  %1777 = vmatpush2.bf16.msra.mxu0 0
  %1778 = vmatprep.mubr.bf16.mxu0 0
  %1779 = vmatmul.mubr.bf16.gmra.mxu0 %v1744
  %v1780 = vpop.f32.mrf.mxu0
  %v1781 = vadd.f32 0.0, %v1780
  %v1782 = vpop.f32.mrf.mxu0
  %v1783 = vadd.f32 0.0, %v1782
  %v1784 = vpop.f32.mrf.mxu0
  %v1785 = vpop.f32.mrf.mxu0
  %1786 = vdwg.mxu0
  %v1787 = vld [vmem:[%s3 + $0x40] sm:$0x11]
  %v1788 = vunpack.c.l.bf16 %v1787
  %v1789 = vunpack.c.h.bf16 %v1787
  %v1790 = vlaneseq
  %v1791 = vshrl.u32 %v1790, 7
  %v1792 = vsub.s32 0, %v1791
  %v1793 = vrot.slane %v1788, %v1792
  %v1794 = vlaneseq
  %v1795 = vshrl.u32 %v1794, 7
  %v1796 = vsub.s32 0, %v1795
  %v1797 = vrot.slane %v1789, %v1796
  %v1798 = vmul.f32 %v1781, %v1793
  %v1799 = vmul.f32 %v1783, %v1797
  %v1800 = vlaneseq
  %v1801 = vshrl.u32 %v1800, 7
  %v1802 = vsub.s32 1, %v1801
  %v1803 = vrot.slane %v1788, %v1802
  %v1804 = vlaneseq
  %v1805 = vshrl.u32 %v1804, 7
  %v1806 = vsub.s32 1, %v1805
  %v1807 = vrot.slane %v1789, %v1806
  %v1808 = vmul.f32 %v1781, %v1803
  %v1809 = vmul.f32 %v1783, %v1807
  %v1812 = vrot.slane %v1808, 2
  %v1813 = vrot.slane %v1809, 2
  %v1816 = vadd.f32 %v1798, %v1812
  %v1817 = vadd.f32 %v1799, %v1813
  %vm1818 = vcmask 1041408
  %v1819 = vsel %vm1818, %v1816, 0.0
  %v1820 = vsel %vm1818, %v1817, 0.0
  %v1821 = vadd.f32 %v1819, %v1820
  %1822 = vadd.xlane.f32.xlu0 %v1821
  %v1823 = vpop.xlane.xlu0 %1822
  %v1824 = vmul.f32 %v1823, 0.16666667
  %v1825 = vld [vmem:[%s4 + $0x3] ss:$0 sm:$0xff]
  %v1826 = vadd.f32 %v1824, %v1825
  %vm1827 = vcmask 1024
  %1828 = vst.msk [vmem:[%s5] sm:$0x3] %vm1827, %v1826
  // Predicated region
  $region22: #{bert_classifier_forward.1} parent=0 // pred_check
    _
  $region23: #{bert_classifier_forward.1} parent=0 // pred_check_branch
    %1830 = sbr.rel (0) target = $region25
  $region24: #{bert_classifier_forward.1} parent=0 // pred_region
    _
  $region25: #{bert_classifier_forward.1} parent=0 // pred_fallthru
    _
  // Predicated region
  $region26: #{bert_classifier_forward.1} parent=0 // pred_check
    _
  $region27: #{bert_classifier_forward.1} parent=0 // pred_check_branch
    %1832 = sbr.rel (0) target = $region29
  $region28: #{bert_classifier_forward.1} parent=0 // pred_region
    _
  $region29: #{bert_classifier_forward.1} parent=0 // pred_fallthru
    _

</llo_original>
